<compile_context>
chip_gen: v5e
topology: v5e:2x2
jax: 0.10.0
libtpu: 0.0.40
codegen_flags: <defaults>
</compile_context>

<pallas_src>
import jax
import jax.numpy as jnp
from jax.experimental import pallas as pl
from jax.experimental.pallas import tpu as pltpu


_VMEM_LIMIT = 32 * 1024 * 1024      # explicit scoped VMEM (safe on v5e/v6e/v7x)
_LAYER_VMEM_BUDGET = 24 * 1024 * 1024
_FUSED_VMEM_BUDGET = 20 * 1024 * 1024


def _round_up(x, m):
    return ((x + m - 1) // m) * m


def _pick_tile(n, candidates, min_programs=2):
    """Largest candidate tile that divides n and leaves >= min_programs steps
    (keeps both v7x TensorCores busy on the 'parallel' row axis)."""
    for t in candidates:
        if t <= n and n % t == 0 and n // t >= min_programs:
            return t
    return n


# ---------------------------------------------------------------------------
# Fused small-graph kernel: all layers in one pallas_call, A / h resident.
# ---------------------------------------------------------------------------
def _gin_fused_kernel(a_ref, x_ref, w_ref, b_ref, o_ref):
    # a: [N, N] bf16, x: [N, F] bf16, w: [L, F, F] bf16, b: [L, 1, F] f32,
    # o: [N, F] f32.
    n_layers = w_ref.shape[0]
    h = x_ref[...]  # bf16
    for l in range(n_layers):
        # Hoisted projection: (A @ h) @ W == A @ (h @ W); both matmuls run as
        # bf16 MXU passes with f32 accumulation.
        xw = jnp.dot(
            h, w_ref[l], preferred_element_type=jnp.float32
        ).astype(jnp.bfloat16)
        hf = jnp.dot(
            a_ref[...], xw, preferred_element_type=jnp.float32
        ) + b_ref[l]
        if l + 1 < n_layers:
            h = hf.astype(jnp.bfloat16)
        else:
            o_ref[...] = hf.astype(o_ref.dtype)


def _gin_fused(adj_bf16, x_bf16, w_stack, b_stack):
    n_pad = adj_bf16.shape[0]
    f_pad = x_bf16.shape[1]
    n_layers = w_stack.shape[0]
    return pl.pallas_call(
        _gin_fused_kernel,
        out_shape=jax.ShapeDtypeStruct((n_pad, f_pad), jnp.float32),
        grid_spec=pltpu.PrefetchScalarGridSpec(
            num_scalar_prefetch=0,
            grid=(1,),
            in_specs=[
                pl.BlockSpec((n_pad, n_pad), lambda i: (0, 0)),
                pl.BlockSpec((n_pad, f_pad), lambda i: (0, 0)),
                pl.BlockSpec((n_layers, f_pad, f_pad), lambda i: (0, 0, 0)),
                pl.BlockSpec((n_layers, 1, f_pad), lambda i: (0, 0, 0)),
            ],
            out_specs=pl.BlockSpec((n_pad, f_pad), lambda i: (0, 0)),
        ),
        compiler_params=pltpu.CompilerParams(
            vmem_limit_bytes=_VMEM_LIMIT,
        ),
    )(adj_bf16, x_bf16, w_stack, b_stack)


# ---------------------------------------------------------------------------
# Per-layer kernels (larger graphs): A @ XW + b, XW precomputed (W hoisted).
# ---------------------------------------------------------------------------
def _layer_resident_kernel(a_ref, xw_ref, b_ref, o_ref):
    # a: [tm, N] bf16 tile, xw: [N, F] bf16 (fully resident), b: [1, F] f32.
    agg = jnp.dot(a_ref[...], xw_ref[...], preferred_element_type=jnp.float32)
    o_ref[...] = (agg + b_ref[...]).astype(o_ref.dtype)


def _layer_ktiled_kernel(a_ref, xw_ref, b_ref, o_ref, acc_ref):
    # a: [tm, tk] bf16, xw: [tk, F] bf16, acc: [tm, F] f32 VMEM accumulator.
    k = pl.program_id(1)

    @pl.when(k == 0)
    def _():
        acc_ref[...] = jnp.zeros_like(acc_ref)

    acc_ref[...] += jnp.dot(
        a_ref[...], xw_ref[...], preferred_element_type=jnp.float32
    )

    @pl.when(k == pl.num_programs(1) - 1)
    def _():
        o_ref[...] = (acc_ref[...] + b_ref[...]).astype(o_ref.dtype)


def graph_conv_layer(adj_bf16, xw_bf16, bias2d, out_dtype):
    """One GraphConv layer with the W projection already applied: A @ XW + b."""
    n_pad = adj_bf16.shape[0]
    f_pad = xw_bf16.shape[1]
    out_bytes = jnp.dtype(out_dtype).itemsize
    tm = _pick_tile(n_pad, (512, 256, 128))

    # Whole-X residency when it fits (A stream becomes the only re-read):
    # budget counts double-buffered pipeline copies of every operand.
    resident_bytes = (
        2 * tm * n_pad * 2          # A tiles (bf16)
        + 2 * n_pad * f_pad * 2     # XW resident (bf16)
        + 2 * tm * f_pad * out_bytes
        + 2 * f_pad * 4             # bias
    )
    if resident_bytes <= _LAYER_VMEM_BUDGET:
        return pl.pallas_call(
            _layer_resident_kernel,
            out_shape=jax.ShapeDtypeStruct((n_pad, f_pad), out_dtype),
            grid_spec=pltpu.PrefetchScalarGridSpec(
                num_scalar_prefetch=0,
                grid=(n_pad // tm,),
                in_specs=[
                    pl.BlockSpec((tm, n_pad), lambda i: (i, 0)),
                    pl.BlockSpec((n_pad, f_pad), lambda i: (0, 0)),
                    pl.BlockSpec((1, f_pad), lambda i: (0, 0)),
                ],
                out_specs=pl.BlockSpec((tm, f_pad), lambda i: (i, 0)),
            ),
            compiler_params=pltpu.CompilerParams(
                dimension_semantics=("parallel",),
                vmem_limit_bytes=_VMEM_LIMIT,
            ),
        )(adj_bf16, xw_bf16, bias2d)

    # K-tiled fallback: big tiles on the neighbor axis, f32 VMEM accumulator,
    # bias add + single downcast store at k == last.
    tk = _pick_tile(n_pad, (1024, 512, 256, 128), min_programs=1)
    return pl.pallas_call(
        _layer_ktiled_kernel,
        out_shape=jax.ShapeDtypeStruct((n_pad, f_pad), out_dtype),
        grid_spec=pltpu.PrefetchScalarGridSpec(
            num_scalar_prefetch=0,
            grid=(n_pad // tm, n_pad // tk),
            in_specs=[
                pl.BlockSpec((tm, tk), lambda i, k: (i, k)),
                pl.BlockSpec((tk, f_pad), lambda i, k: (k, 0)),
                pl.BlockSpec((1, f_pad), lambda i, k: (0, 0)),
            ],
            out_specs=pl.BlockSpec((tm, f_pad), lambda i, k: (i, 0)),
            scratch_shapes=[pltpu.VMEM((tm, f_pad), jnp.float32)],
        ),
        compiler_params=pltpu.CompilerParams(
            dimension_semantics=("parallel", "arbitrary"),
            vmem_limit_bytes=_VMEM_LIMIT,
        ),
    )(adj_bf16, xw_bf16, bias2d)


# ---------------------------------------------------------------------------
# Full forward pass.
# ---------------------------------------------------------------------------
def _fused_fits(n_pad, f_pad, n_layers):
    a = n_pad * n_pad * 2
    x = n_pad * f_pad * 2
    w = n_layers * f_pad * f_pad * 2
    b = n_layers * f_pad * 4
    out = n_pad * f_pad * 4
    work = 2 * n_pad * f_pad * 4  # in-kernel f32 temporaries
    return 2 * (a + x + w + b + out) + work <= _FUSED_VMEM_BUDGET


def gin_forward(adj, feat, weights, biases, *, fuse_layers=None):
    """GIN_Model.forward: stack of GraphConv layers.

    adj:     [N, N] f32 normalized adjacency (D^-1/2 (A+I) D^-1/2)
    feat:    [N, F] f32 node features (in_feats == out_feats for a stack)
    weights: list of [F, F] f32
    biases:  list of [F]    f32
    """
    N, F = feat.shape
    n_layers = len(weights)
    n_pad = _round_up(max(N, 128), 128)
    f_pad = _round_up(max(F, 128), 128)

    adj_p = jnp.pad(adj, ((0, n_pad - N), (0, n_pad - N))).astype(jnp.bfloat16)
    x_p = jnp.pad(feat, ((0, n_pad - N), (0, f_pad - F))).astype(jnp.bfloat16)
    w_p = [
        jnp.pad(w, ((0, f_pad - w.shape[0]), (0, f_pad - w.shape[1]))).astype(
            jnp.bfloat16
        )
        for w in weights
    ]
    b_p = [
        jnp.pad(b, (0, f_pad - b.shape[0])).reshape(1, f_pad).astype(jnp.float32)
        for b in biases
    ]

    if fuse_layers is None:
        fuse_layers = _fused_fits(n_pad, f_pad, n_layers)

    if fuse_layers:
        out = _gin_fused(adj_p, x_p, jnp.stack(w_p), jnp.stack(b_p))
        return out[:N, :F]

    # Per-layer path: hoist the W projection as a tiny XLA bf16 matmul, feed
    # XW to the Pallas kernel, emit bf16 intermediates (f32 only for the last
    # layer's output).
    h = x_p
    for l in range(n_layers):
        xw = jnp.dot(
            h, w_p[l], preferred_element_type=jnp.float32
        ).astype(jnp.bfloat16)
        out_dtype = jnp.float32 if l + 1 == n_layers else jnp.bfloat16
        h = graph_conv_layer(adj_p, xw, b_p[l], out_dtype)
    return h[:N, :F]


def gin_reference(adj, feat, weights, biases):
    """Plain-JAX reference with the same bf16-input / f32-accumulate flow."""
    adj_b = adj.astype(jnp.bfloat16).astype(jnp.float32)
    h = feat.astype(jnp.bfloat16).astype(jnp.float32)
    n_layers = len(weights)
    for l, (w, b) in enumerate(zip(weights, biases)):
        wb = w.astype(jnp.bfloat16).astype(jnp.float32)
        xw = (h @ wb).astype(jnp.bfloat16).astype(jnp.float32)
        h = adj_b @ xw + b[None, :]
        if l + 1 < n_layers:
            h = h.astype(jnp.bfloat16).astype(jnp.float32)
    return h


if __name__ == "__main__":
    key = jax.random.PRNGKey(0)
    k_feat, k_adj, k_w, k_b = jax.random.split(key, 4)

    # GIN_Model stacks GraphConv(in_feats, out_feats) layers applied to the
    # previous layer's output, so a consistent stack needs in_feats == out_feats.
    N = 256
    in_feats = 128
    out_feats = 128
    n_layers = 4

    # Node features.
    feat = jax.random.normal(k_feat, (N, in_feats), dtype=jnp.float32)

    # Deterministic random graph -> dense adjacency with self loops,
    # symmetric normalization D^{-1/2} (A + I) D^{-1/2}  (GraphConv norm='both').
    raw = (jax.random.uniform(k_adj, (N, N)) < 0.05).astype(jnp.float32)
    a = jnp.maximum(raw, raw.T) + jnp.eye(N, dtype=jnp.float32)
    a = jnp.minimum(a, 1.0)
    deg = a.sum(axis=1)
    d_inv_sqrt = 1.0 / jnp.sqrt(deg)
    adj = a * d_inv_sqrt[:, None] * d_inv_sqrt[None, :]

    # Deterministic per-layer parameters (Glorot-ish scaling).
    scale = 1.0 / jnp.sqrt(jnp.float32(in_feats))
    w_keys = jax.random.split(k_w, n_layers)
    b_keys = jax.random.split(k_b, n_layers)
    weights = [
        jax.random.normal(kk, (in_feats, out_feats), dtype=jnp.float32) * scale
        for kk in w_keys
    ]
    biases = [
        jax.random.normal(kk, (out_feats,), dtype=jnp.float32) * 0.01
        for kk in b_keys
    ]

    ref = gin_reference(adj, feat, weights, biases)

    # Fused single-kernel path (auto-selected for this small graph).
    out_fused = jax.block_until_ready(gin_forward(adj, feat, weights, biases))
    assert out_fused.shape == (N, out_feats)
    err_f = float(jnp.max(jnp.abs(out_fused - ref)))
    assert jnp.allclose(out_fused, ref, atol=2e-2, rtol=2e-2), err_f

    # Per-layer path (what larger graphs would use) -- exercised for coverage.
    out_layered = jax.block_until_ready(
        gin_forward(adj, feat, weights, biases, fuse_layers=False)
    )
    assert out_layered.shape == (N, out_feats)
    err_l = float(jnp.max(jnp.abs(out_layered - ref)))
    assert jnp.allclose(out_layered, ref, atol=2e-2, rtol=2e-2), err_l

    print("KERNEL_OK")
</pallas_src>

<mosaic_0001>
module attributes {stable_mosaic.version = 11 : i64} {
  func.func @_gin_fused_kernel(%arg0: i32, %arg1: memref<256x256xbf16, #tpu.memory_space<vmem>>, %arg2: memref<256x128xbf16, #tpu.memory_space<vmem>>, %arg3: memref<4x128x128xbf16, #tpu.memory_space<vmem>>, %arg4: memref<4x1x128xf32, #tpu.memory_space<vmem>>, %arg5: memref<256x128xf32, #tpu.memory_space<vmem>>) attributes {dimension_semantics = [#tpu.dimension_semantics<arbitrary>], iteration_bounds = array<i64: 1>, scalar_prefetch = 0 : i64, scratch_operands = 0 : i64, tpu.core_type = #tpu.core_type<tc>, window_params = [{pipeline_mode = #tpu.pipeline_mode<synchronous>, transform_indices = @transform_0, window_bounds = array<i64: 256, 256>}, {pipeline_mode = #tpu.pipeline_mode<synchronous>, transform_indices = @transform_1, window_bounds = array<i64: 256, 128>}, {pipeline_mode = #tpu.pipeline_mode<synchronous>, transform_indices = @transform_2, window_bounds = array<i64: 4, 128, 128>}, {pipeline_mode = #tpu.pipeline_mode<synchronous>, transform_indices = @transform_3, window_bounds = array<i64: 4, 1, 128>}, {pipeline_mode = #tpu.pipeline_mode<synchronous>, transform_indices = @transform_4, window_bounds = array<i64: 256, 128>}]} {
    %c0 = arith.constant 0 : index
    %c0_0 = arith.constant 0 : index
    %0 = vector.load %arg2[%c0, %c0_0] : memref<256x128xbf16, #tpu.memory_space<vmem>>, vector<256x128xbf16>
    %c0_1 = arith.constant 0 : index
    %c0_2 = arith.constant 0 : index
    %c0_3 = arith.constant 0 : index
    %1 = vector.load %arg3[%c0_1, %c0_2, %c0_3] : memref<4x128x128xbf16, #tpu.memory_space<vmem>>, vector<1x128x128xbf16>
    %2 = vector.shape_cast %1 : vector<1x128x128xbf16> to vector<128x128xbf16>
    %cst = arith.constant dense<0.000000e+00> : vector<256x128xf32>
    %3 = tpu.matmul %0, %2, %cst {dimension_numbers = #tpu.dot_dimension_numbers<[1], [0], [0], [1], [0, 0, 1, 1], [], []>} : vector<256x128xbf16>, vector<128x128xbf16>, vector<256x128xf32> -> vector<256x128xf32>
    %4 = arith.truncf %3 : vector<256x128xf32> to vector<256x128xbf16>
    %c0_4 = arith.constant 0 : index
    %c0_5 = arith.constant 0 : index
    %5 = vector.load %arg1[%c0_4, %c0_5] : memref<256x256xbf16, #tpu.memory_space<vmem>>, vector<256x256xbf16>
    %cst_6 = arith.constant dense<0.000000e+00> : vector<256x128xf32>
    %6 = tpu.matmul %5, %4, %cst_6 {dimension_numbers = #tpu.dot_dimension_numbers<[1], [0], [0], [1], [0, 0, 1, 1], [], []>} : vector<256x256xbf16>, vector<256x128xbf16>, vector<256x128xf32> -> vector<256x128xf32>
    %c0_7 = arith.constant 0 : index
    %c0_8 = arith.constant 0 : index
    %c0_9 = arith.constant 0 : index
    %7 = vector.load %arg4[%c0_7, %c0_8, %c0_9] : memref<4x1x128xf32, #tpu.memory_space<vmem>>, vector<1x1x128xf32>
    %8 = vector.shape_cast %7 : vector<1x1x128xf32> to vector<1x128xf32>
    %9 = vector.broadcast %8 : vector<1x128xf32> to vector<256x128xf32>
    %10 = arith.addf %6, %9 : vector<256x128xf32>
    %11 = arith.truncf %10 : vector<256x128xf32> to vector<256x128xbf16>
    %c1 = arith.constant 1 : index
    %c0_10 = arith.constant 0 : index
    %c0_11 = arith.constant 0 : index
    %12 = vector.load %arg3[%c1, %c0_10, %c0_11] : memref<4x128x128xbf16, #tpu.memory_space<vmem>>, vector<1x128x128xbf16>
    %13 = vector.shape_cast %12 : vector<1x128x128xbf16> to vector<128x128xbf16>
    %cst_12 = arith.constant dense<0.000000e+00> : vector<256x128xf32>
    %14 = tpu.matmul %11, %13, %cst_12 {dimension_numbers = #tpu.dot_dimension_numbers<[1], [0], [0], [1], [0, 0, 1, 1], [], []>} : vector<256x128xbf16>, vector<128x128xbf16>, vector<256x128xf32> -> vector<256x128xf32>
    %15 = arith.truncf %14 : vector<256x128xf32> to vector<256x128xbf16>
    %c0_13 = arith.constant 0 : index
    %c0_14 = arith.constant 0 : index
    %16 = vector.load %arg1[%c0_13, %c0_14] : memref<256x256xbf16, #tpu.memory_space<vmem>>, vector<256x256xbf16>
    %cst_15 = arith.constant dense<0.000000e+00> : vector<256x128xf32>
    %17 = tpu.matmul %16, %15, %cst_15 {dimension_numbers = #tpu.dot_dimension_numbers<[1], [0], [0], [1], [0, 0, 1, 1], [], []>} : vector<256x256xbf16>, vector<256x128xbf16>, vector<256x128xf32> -> vector<256x128xf32>
    %c1_16 = arith.constant 1 : index
    %c0_17 = arith.constant 0 : index
    %c0_18 = arith.constant 0 : index
    %18 = vector.load %arg4[%c1_16, %c0_17, %c0_18] : memref<4x1x128xf32, #tpu.memory_space<vmem>>, vector<1x1x128xf32>
    %19 = vector.shape_cast %18 : vector<1x1x128xf32> to vector<1x128xf32>
    %20 = vector.broadcast %19 : vector<1x128xf32> to vector<256x128xf32>
    %21 = arith.addf %17, %20 : vector<256x128xf32>
    %22 = arith.truncf %21 : vector<256x128xf32> to vector<256x128xbf16>
    %c2 = arith.constant 2 : index
    %c0_19 = arith.constant 0 : index
    %c0_20 = arith.constant 0 : index
    %23 = vector.load %arg3[%c2, %c0_19, %c0_20] : memref<4x128x128xbf16, #tpu.memory_space<vmem>>, vector<1x128x128xbf16>
    %24 = vector.shape_cast %23 : vector<1x128x128xbf16> to vector<128x128xbf16>
    %cst_21 = arith.constant dense<0.000000e+00> : vector<256x128xf32>
    %25 = tpu.matmul %22, %24, %cst_21 {dimension_numbers = #tpu.dot_dimension_numbers<[1], [0], [0], [1], [0, 0, 1, 1], [], []>} : vector<256x128xbf16>, vector<128x128xbf16>, vector<256x128xf32> -> vector<256x128xf32>
    %26 = arith.truncf %25 : vector<256x128xf32> to vector<256x128xbf16>
    %c0_22 = arith.constant 0 : index
    %c0_23 = arith.constant 0 : index
    %27 = vector.load %arg1[%c0_22, %c0_23] : memref<256x256xbf16, #tpu.memory_space<vmem>>, vector<256x256xbf16>
    %cst_24 = arith.constant dense<0.000000e+00> : vector<256x128xf32>
    %28 = tpu.matmul %27, %26, %cst_24 {dimension_numbers = #tpu.dot_dimension_numbers<[1], [0], [0], [1], [0, 0, 1, 1], [], []>} : vector<256x256xbf16>, vector<256x128xbf16>, vector<256x128xf32> -> vector<256x128xf32>
    %c2_25 = arith.constant 2 : index
    %c0_26 = arith.constant 0 : index
    %c0_27 = arith.constant 0 : index
    %29 = vector.load %arg4[%c2_25, %c0_26, %c0_27] : memref<4x1x128xf32, #tpu.memory_space<vmem>>, vector<1x1x128xf32>
    %30 = vector.shape_cast %29 : vector<1x1x128xf32> to vector<1x128xf32>
    %31 = vector.broadcast %30 : vector<1x128xf32> to vector<256x128xf32>
    %32 = arith.addf %28, %31 : vector<256x128xf32>
    %33 = arith.truncf %32 : vector<256x128xf32> to vector<256x128xbf16>
    %c3 = arith.constant 3 : index
    %c0_28 = arith.constant 0 : index
    %c0_29 = arith.constant 0 : index
    %34 = vector.load %arg3[%c3, %c0_28, %c0_29] : memref<4x128x128xbf16, #tpu.memory_space<vmem>>, vector<1x128x128xbf16>
    %35 = vector.shape_cast %34 : vector<1x128x128xbf16> to vector<128x128xbf16>
    %cst_30 = arith.constant dense<0.000000e+00> : vector<256x128xf32>
    %36 = tpu.matmul %33, %35, %cst_30 {dimension_numbers = #tpu.dot_dimension_numbers<[1], [0], [0], [1], [0, 0, 1, 1], [], []>} : vector<256x128xbf16>, vector<128x128xbf16>, vector<256x128xf32> -> vector<256x128xf32>
    %37 = arith.truncf %36 : vector<256x128xf32> to vector<256x128xbf16>
    %c0_31 = arith.constant 0 : index
    %c0_32 = arith.constant 0 : index
    %38 = vector.load %arg1[%c0_31, %c0_32] : memref<256x256xbf16, #tpu.memory_space<vmem>>, vector<256x256xbf16>
    %cst_33 = arith.constant dense<0.000000e+00> : vector<256x128xf32>
    %39 = tpu.matmul %38, %37, %cst_33 {dimension_numbers = #tpu.dot_dimension_numbers<[1], [0], [0], [1], [0, 0, 1, 1], [], []>} : vector<256x256xbf16>, vector<256x128xbf16>, vector<256x128xf32> -> vector<256x128xf32>
    %c3_34 = arith.constant 3 : index
    %c0_35 = arith.constant 0 : index
    %c0_36 = arith.constant 0 : index
    %40 = vector.load %arg4[%c3_34, %c0_35, %c0_36] : memref<4x1x128xf32, #tpu.memory_space<vmem>>, vector<1x1x128xf32>
    %41 = vector.shape_cast %40 : vector<1x1x128xf32> to vector<1x128xf32>
    %42 = vector.broadcast %41 : vector<1x128xf32> to vector<256x128xf32>
    %43 = arith.addf %39, %42 : vector<256x128xf32>
    %c0_37 = arith.constant 0 : index
    %c0_38 = arith.constant 0 : index
    %44 = vector.load %arg5[%c0_37, %c0_38] : memref<256x128xf32, #tpu.memory_space<vmem>>, vector<256x128xf32>
    tpu.vector_store %arg5[%c0_37, %c0_38], %43 {strides = array<i32>} : memref<256x128xf32, #tpu.memory_space<vmem>>, vector<256x128xf32>,
    return
  }
  func.func @transform_0(%arg0: i32) -> (i32, i32) {
    %c0_i32 = arith.constant 0 : i32
    %c0_i32_0 = arith.constant 0 : i32
    %c0_i32_1 = arith.constant 0 : i32
    return %c0_i32, %c0_i32_0 : i32, i32
  }
  func.func @transform_1(%arg0: i32) -> (i32, i32) {
    %c0_i32 = arith.constant 0 : i32
    %c0_i32_0 = arith.constant 0 : i32
    %c0_i32_1 = arith.constant 0 : i32
    return %c0_i32, %c0_i32_0 : i32, i32
  }
  func.func @transform_2(%arg0: i32) -> (i32, i32, i32) {
    %c0_i32 = arith.constant 0 : i32
    %c0_i32_0 = arith.constant 0 : i32
    %c0_i32_1 = arith.constant 0 : i32
    %c0_i32_2 = arith.constant 0 : i32
    return %c0_i32, %c0_i32_0, %c0_i32_1 : i32, i32, i32
  }
  func.func @transform_3(%arg0: i32) -> (i32, i32, i32) {
    %c0_i32 = arith.constant 0 : i32
    %c0_i32_0 = arith.constant 0 : i32
    %c0_i32_1 = arith.constant 0 : i32
    %c0_i32_2 = arith.constant 0 : i32
    return %c0_i32, %c0_i32_0, %c0_i32_1 : i32, i32, i32
  }
  func.func @transform_4(%arg0: i32) -> (i32, i32) {
    %c0_i32 = arith.constant 0 : i32
    %c0_i32_0 = arith.constant 0 : i32
    %c0_i32_1 = arith.constant 0 : i32
    return %c0_i32, %c0_i32_0 : i32, i32
  }
}

</mosaic_0001>

<llo_original>
// kernel: tpu_custom_call.1
$region0: #{tpu_custom_call.1}
  #allocation0 [shape = 'u32[]', space=smem, size = 0x4, offset = 0x4, fixed_abs, tag = 'smem constant byte address 0x4 - core index']
  #allocation1 [shape = 'u32[72,128]{1,0:T(1,128)}', space=vmem, size = 0x9000, scoped, tag = 'internal scratch']
  %s0 = inlined_call_operand.hbm [shape: bf16[256,256], index: 0, kind: input, shape index: {}]
  %s1 = inlined_call_operand.hbm [shape: bf16[256,128], index: 1, kind: input, shape index: {}]
  %s2 = inlined_call_operand.hbm [shape: bf16[4,128,128], index: 2, kind: input, shape index: {}]
  %s3 = inlined_call_operand.hbm [shape: f32[4,1,128], index: 3, kind: input, shape index: {}]
  %s4 = inlined_call_operand.hbm [shape: f32[256,128], index: 4, kind: output, shape index: {}]
  %s5 = sld [smem:[#allocation0]]
  $region42: #{tpu_custom_call.1} parent=0
    _
  %s7 = ssub.s32 1, %s5
  %s8 = scalar_select 0, %s7, %s5
  $region1: #{tpu_custom_call.1} parent=0
    #allocation2 [shape = 'u8[131072]{0}', space=vmem, size = 0x20000, scoped, tag = 'input window, operand 0, single buffered']
    #allocation3 [shape = 's32[1]{0}', space=sflag, size = 0x4, scoped, tag = 'scoped memory for tpu_custom_call.1']
    #allocation4 [shape = 's32[1]{0}', space=sflag, size = 0x4, scoped, tag = 'scoped memory for tpu_custom_call.1']
    #allocation5 [shape = 'u8[65536]{0}', space=vmem, size = 0x10000, scoped, tag = 'input window, operand 1, single buffered']
    #allocation6 [shape = 's32[1]{0}', space=sflag, size = 0x4, scoped, tag = 'scoped memory for tpu_custom_call.1']
    #allocation7 [shape = 'u8[131072]{0}', space=vmem, size = 0x20000, scoped, tag = 'input window, operand 2, single buffered']
    #allocation8 [shape = 'u8[2048]{0}', space=vmem, size = 0x800, scoped, tag = 'input window, operand 3, single buffered']
    #allocation9 [shape = 's32[1]{0}', space=sflag, size = 0x4, scoped, tag = 'scoped memory for tpu_custom_call.1']
    #allocation10 [shape = 'u8[131072]{0}', space=vmem, size = 0x20000, scoped, tag = 'output window, operand 0, single buffered']
    %9 = vsyncpa [#allocation3], 0
    %10 = vsyncpa [#allocation6], 0
    %11 = vsyncpa [#allocation9], 0
    %12 = vsyncpa [#allocation4], 0
    // Predicated region
    $region2: #{tpu_custom_call.1} parent=1 // pred_check
      _
    $region3: #{tpu_custom_call.1} parent=1 // pred_check_branch
      %14 = sbr.rel (0) target = $region5
    $region4: #{tpu_custom_call.1} parent=1 // pred_region
      %16 = vsyncadd [#allocation3], 0
      %s17 = sshll.u32 %s0, 4
      %s18 = int_to_ptr.hbm [resolvable:$true] %s17
      %s19 = sshll.u32 [#allocation2], 4
      %s20 = int_to_ptr.vmem [resolvable:$true] %s19
      %25 = dma.hbm_to_vmem [thread:$0]  %s18, 4096, %s20, [#allocation3], 128, 128, 8
    $region5: #{tpu_custom_call.1} parent=1 // pred_fallthru
      _
    // Predicated region
    $region6: #{tpu_custom_call.1} parent=1 // pred_check
      _
    $region7: #{tpu_custom_call.1} parent=1 // pred_check_branch
      %27 = sbr.rel (0) target = $region9
    $region8: #{tpu_custom_call.1} parent=1 // pred_region
      %29 = vsyncadd [#allocation6], 0
      %s30 = sshll.u32 %s1, 4
      %s31 = int_to_ptr.hbm [resolvable:$true] %s30
      %s32 = sshll.u32 [#allocation5], 4
      %s33 = int_to_ptr.vmem [resolvable:$true] %s32
      %38 = dma.hbm_to_vmem [thread:$0]  %s31, 2048, %s33, [#allocation6], 64, 64, 4
    $region9: #{tpu_custom_call.1} parent=1 // pred_fallthru
      _
    // Predicated region
    $region10: #{tpu_custom_call.1} parent=1 // pred_check
      _
    $region11: #{tpu_custom_call.1} parent=1 // pred_check_branch
      %40 = sbr.rel (0) target = $region13
    $region12: #{tpu_custom_call.1} parent=1 // pred_region
      %42 = vsyncadd [#allocation6], 0
      %s43 = sshll.u32 %s2, 4
      %s44 = int_to_ptr.hbm [resolvable:$true] %s43
      %s45 = sshll.u32 [#allocation7], 4
      %s46 = int_to_ptr.vmem [resolvable:$true] %s45
      %51 = dma.hbm_to_vmem [thread:$0]  %s44, 4096, %s46, [#allocation6], 64, 64, 4
    $region13: #{tpu_custom_call.1} parent=1 // pred_fallthru
      _
    // Predicated region
    $region14: #{tpu_custom_call.1} parent=1 // pred_check
      _
    $region15: #{tpu_custom_call.1} parent=1 // pred_check_branch
      %53 = sbr.rel (0) target = $region17
    $region16: #{tpu_custom_call.1} parent=1 // pred_region
      %55 = vsyncadd [#allocation9], 0
      %s56 = sshll.u32 %s3, 4
      %s57 = int_to_ptr.hbm [resolvable:$true] %s56
      %s58 = sshll.u32 [#allocation8], 4
      %s59 = int_to_ptr.vmem [resolvable:$true] %s58
      %64 = dma.hbm_to_vmem [thread:$0]  %s57, 64, %s59, [#allocation9], 16, 16, 1
    $region17: #{tpu_custom_call.1} parent=1 // pred_fallthru
      _
    // Predicated region
    $region18: #{tpu_custom_call.1} parent=1 // pred_check
      _
    $region19: #{tpu_custom_call.1} parent=1 // pred_check_branch
      %66 = sbr.rel (0) target = $region21
    $region20: #{tpu_custom_call.1} parent=1 // pred_region
      %68 = dma.done [#allocation3], 4096
    $region21: #{tpu_custom_call.1} parent=1 // pred_fallthru
      _
    // Predicated region
    $region22: #{tpu_custom_call.1} parent=1 // pred_check
      _
    $region23: #{tpu_custom_call.1} parent=1 // pred_check_branch
      %70 = sbr.rel (0) target = $region25
    $region24: #{tpu_custom_call.1} parent=1 // pred_region
      %72 = dma.done [#allocation6], 2048
    $region25: #{tpu_custom_call.1} parent=1 // pred_fallthru
      _
    // Predicated region
    $region26: #{tpu_custom_call.1} parent=1 // pred_check
      _
    $region27: #{tpu_custom_call.1} parent=1 // pred_check_branch
      %74 = sbr.rel (0) target = $region29
    $region28: #{tpu_custom_call.1} parent=1 // pred_region
      %76 = dma.done [#allocation6], 4096
    $region29: #{tpu_custom_call.1} parent=1 // pred_fallthru
      _
    // Predicated region
    $region30: #{tpu_custom_call.1} parent=1 // pred_check
      _
    $region31: #{tpu_custom_call.1} parent=1 // pred_check_branch
      %78 = sbr.rel (0) target = $region33
    $region32: #{tpu_custom_call.1} parent=1 // pred_region
      %80 = dma.done [#allocation9], 64
    $region33: #{tpu_custom_call.1} parent=1 // pred_fallthru
      _
    %v81 = vld [vmem:[#allocation5] sm:$0xf]
    %v82 = vld [vmem:[#allocation5 + $0x4] sm:$0xf]
    %v83 = vld [vmem:[#allocation5 + $0x8] sm:$0xf]
    %v84 = vld [vmem:[#allocation5 + $0xc] sm:$0xf]
    %v85 = vld [vmem:[#allocation5 + $0x10] sm:$0xf]
    %v86 = vld [vmem:[#allocation5 + $0x14] sm:$0xf]
    %v87 = vld [vmem:[#allocation5 + $0x18] sm:$0xf]
    %v88 = vld [vmem:[#allocation5 + $0x1c] sm:$0xf]
    %v89 = vld [vmem:[#allocation5 + $0x20] sm:$0xf]
    %v90 = vld [vmem:[#allocation5 + $0x24] sm:$0xf]
    %v91 = vld [vmem:[#allocation5 + $0x28] sm:$0xf]
    %v92 = vld [vmem:[#allocation5 + $0x2c] sm:$0xf]
    %v93 = vld [vmem:[#allocation5 + $0x30] sm:$0xf]
    %v94 = vld [vmem:[#allocation5 + $0x34] sm:$0xf]
    %v95 = vld [vmem:[#allocation5 + $0x38] sm:$0xf]
    %v96 = vld [vmem:[#allocation5 + $0x3c] sm:$0xf]
    %v97 = vld [vmem:[#allocation5 + $0x40] sm:$0xf]
    %v98 = vld [vmem:[#allocation5 + $0x44] sm:$0xf]
    %v99 = vld [vmem:[#allocation5 + $0x48] sm:$0xf]
    %v100 = vld [vmem:[#allocation5 + $0x4c] sm:$0xf]
    %v101 = vld [vmem:[#allocation5 + $0x50] sm:$0xf]
    %v102 = vld [vmem:[#allocation5 + $0x54] sm:$0xf]
    %v103 = vld [vmem:[#allocation5 + $0x58] sm:$0xf]
    %v104 = vld [vmem:[#allocation5 + $0x5c] sm:$0xf]
    %v105 = vld [vmem:[#allocation5 + $0x60] sm:$0xf]
    %v106 = vld [vmem:[#allocation5 + $0x64] sm:$0xf]
    %v107 = vld [vmem:[#allocation5 + $0x68] sm:$0xf]
    %v108 = vld [vmem:[#allocation5 + $0x6c] sm:$0xf]
    %v109 = vld [vmem:[#allocation5 + $0x70] sm:$0xf]
    %v110 = vld [vmem:[#allocation5 + $0x74] sm:$0xf]
    %v111 = vld [vmem:[#allocation5 + $0x78] sm:$0xf]
    %v112 = vld [vmem:[#allocation5 + $0x7c] sm:$0xf]
    %v113 = vld [vmem:[#allocation7] sm:$0xf]
    %v114 = vld [vmem:[#allocation7 + $0x4] sm:$0xf]
    %v115 = vld [vmem:[#allocation7 + $0x8] sm:$0xf]
    %v116 = vld [vmem:[#allocation7 + $0xc] sm:$0xf]
    %v117 = vld [vmem:[#allocation7 + $0x10] sm:$0xf]
    %v118 = vld [vmem:[#allocation7 + $0x14] sm:$0xf]
    %v119 = vld [vmem:[#allocation7 + $0x18] sm:$0xf]
    %v120 = vld [vmem:[#allocation7 + $0x1c] sm:$0xf]
    %v121 = vld [vmem:[#allocation7 + $0x20] sm:$0xf]
    %v122 = vld [vmem:[#allocation7 + $0x24] sm:$0xf]
    %v123 = vld [vmem:[#allocation7 + $0x28] sm:$0xf]
    %v124 = vld [vmem:[#allocation7 + $0x2c] sm:$0xf]
    %v125 = vld [vmem:[#allocation7 + $0x30] sm:$0xf]
    %v126 = vld [vmem:[#allocation7 + $0x34] sm:$0xf]
    %v127 = vld [vmem:[#allocation7 + $0x38] sm:$0xf]
    %v128 = vld [vmem:[#allocation7 + $0x3c] sm:$0xf]
    %v161 = vunpack.c.l.b16 %v81
    %v162 = vunpack.c.l.b16 %v82
    %v163 = vunpack.c.l.b16 %v83
    %v164 = vunpack.c.l.b16 %v84
    %v165 = vunpack.c.l.b16 %v85
    %v166 = vunpack.c.l.b16 %v86
    %v167 = vunpack.c.l.b16 %v87
    %v168 = vunpack.c.l.b16 %v88
    %v169 = vunpack.c.l.b16 %v89
    %v170 = vunpack.c.l.b16 %v90
    %v171 = vunpack.c.l.b16 %v91
    %v172 = vunpack.c.l.b16 %v92
    %v173 = vunpack.c.l.b16 %v93
    %v174 = vunpack.c.l.b16 %v94
    %v175 = vunpack.c.l.b16 %v95
    %v176 = vunpack.c.l.b16 %v96
    %v177 = vunpack.c.l.b16 %v97
    %v178 = vunpack.c.l.b16 %v98
    %v179 = vunpack.c.l.b16 %v99
    %v180 = vunpack.c.l.b16 %v100
    %v181 = vunpack.c.l.b16 %v101
    %v182 = vunpack.c.l.b16 %v102
    %v183 = vunpack.c.l.b16 %v103
    %v184 = vunpack.c.l.b16 %v104
    %v185 = vunpack.c.l.b16 %v105
    %v186 = vunpack.c.l.b16 %v106
    %v187 = vunpack.c.l.b16 %v107
    %v188 = vunpack.c.l.b16 %v108
    %v189 = vunpack.c.l.b16 %v109
    %v190 = vunpack.c.l.b16 %v110
    %v191 = vunpack.c.l.b16 %v111
    %v192 = vunpack.c.l.b16 %v112
    %v193 = vpack.c.b16 %v162, %v161
    %v194 = vpack.c.b16 %v164, %v163
    %v195 = vpack.c.b16 %v166, %v165
    %v196 = vpack.c.b16 %v168, %v167
    %v197 = vpack.c.b16 %v170, %v169
    %v198 = vpack.c.b16 %v172, %v171
    %v199 = vpack.c.b16 %v174, %v173
    %v200 = vpack.c.b16 %v176, %v175
    %v201 = vpack.c.b16 %v178, %v177
    %v202 = vpack.c.b16 %v180, %v179
    %v203 = vpack.c.b16 %v182, %v181
    %v204 = vpack.c.b16 %v184, %v183
    %v205 = vpack.c.b16 %v186, %v185
    %v206 = vpack.c.b16 %v188, %v187
    %v207 = vpack.c.b16 %v190, %v189
    %v208 = vpack.c.b16 %v192, %v191
    %v241 = vunpack.c.l.b16 %v113
    %v242 = vunpack.c.l.b16 %v114
    %v243 = vunpack.c.l.b16 %v115
    %v244 = vunpack.c.l.b16 %v116
    %v245 = vunpack.c.l.b16 %v117
    %v246 = vunpack.c.l.b16 %v118
    %v247 = vunpack.c.l.b16 %v119
    %v248 = vunpack.c.l.b16 %v120
    %v249 = vunpack.c.l.b16 %v121
    %v250 = vunpack.c.l.b16 %v122
    %v251 = vunpack.c.l.b16 %v123
    %v252 = vunpack.c.l.b16 %v124
    %v253 = vunpack.c.l.b16 %v125
    %v254 = vunpack.c.l.b16 %v126
    %v255 = vunpack.c.l.b16 %v127
    %v256 = vunpack.c.l.b16 %v128
    %v257 = vpack.c.b16 %v242, %v241
    %v258 = vpack.c.b16 %v244, %v243
    %v259 = vpack.c.b16 %v246, %v245
    %v260 = vpack.c.b16 %v248, %v247
    %v261 = vpack.c.b16 %v250, %v249
    %v262 = vpack.c.b16 %v252, %v251
    %v263 = vpack.c.b16 %v254, %v253
    %v264 = vpack.c.b16 %v256, %v255
    %273 = vmatpush.bf16.msra.mxu0 %v264
    %274 = vmatpush.bf16.msra.mxu0 %v263
    %275 = vmatpush.bf16.msra.mxu0 %v262
    %276 = vmatpush.bf16.msra.mxu0 %v261
    %277 = vmatpush.bf16.msra.mxu0 %v260
    %278 = vmatpush.bf16.msra.mxu0 %v259
    %279 = vmatpush.bf16.msra.mxu0 %v258
    %280 = vmatpush.bf16.msra.mxu0 %v257
    %281 = vmatmul.bf16.gmra.mxu0 %v193
    %v282 = vpop.f32.mrf.mxu0
    %v283 = vadd.f32 0.0, %v282
    %v284 = vpop.f32.mrf.mxu0
    %v285 = vadd.f32 0.0, %v284
    %286 = vmatmul.bf16.gmra.mxu0 %v194
    %v287 = vpop.f32.mrf.mxu0
    %v288 = vadd.f32 0.0, %v287
    %v289 = vpop.f32.mrf.mxu0
    %v290 = vadd.f32 0.0, %v289
    %291 = vmatmul.bf16.gmra.mxu0 %v195
    %v292 = vpop.f32.mrf.mxu0
    %v293 = vadd.f32 0.0, %v292
    %v294 = vpop.f32.mrf.mxu0
    %v295 = vadd.f32 0.0, %v294
    %296 = vmatmul.bf16.gmra.mxu0 %v196
    %v297 = vpop.f32.mrf.mxu0
    %v298 = vadd.f32 0.0, %v297
    %v299 = vpop.f32.mrf.mxu0
    %v300 = vadd.f32 0.0, %v299
    %301 = vmatmul.bf16.gmra.mxu0 %v197
    %v302 = vpop.f32.mrf.mxu0
    %v303 = vadd.f32 0.0, %v302
    %v304 = vpop.f32.mrf.mxu0
    %v305 = vadd.f32 0.0, %v304
    %306 = vmatmul.bf16.gmra.mxu0 %v198
    %v307 = vpop.f32.mrf.mxu0
    %v308 = vadd.f32 0.0, %v307
    %v309 = vpop.f32.mrf.mxu0
    %v310 = vadd.f32 0.0, %v309
    %311 = vmatmul.bf16.gmra.mxu0 %v199
    %v312 = vpop.f32.mrf.mxu0
    %v313 = vadd.f32 0.0, %v312
    %v314 = vpop.f32.mrf.mxu0
    %v315 = vadd.f32 0.0, %v314
    %316 = vmatmul.bf16.gmra.mxu0 %v200
    %v317 = vpop.f32.mrf.mxu0
    %v318 = vadd.f32 0.0, %v317
    %v319 = vpop.f32.mrf.mxu0
    %v320 = vadd.f32 0.0, %v319
    %321 = vmatmul.bf16.gmra.mxu0 %v201
    %v322 = vpop.f32.mrf.mxu0
    %v323 = vadd.f32 0.0, %v322
    %v324 = vpop.f32.mrf.mxu0
    %v325 = vadd.f32 0.0, %v324
    %326 = vmatmul.bf16.gmra.mxu0 %v202
    %v327 = vpop.f32.mrf.mxu0
    %v328 = vadd.f32 0.0, %v327
    %v329 = vpop.f32.mrf.mxu0
    %v330 = vadd.f32 0.0, %v329
    %331 = vmatmul.bf16.gmra.mxu0 %v203
    %v332 = vpop.f32.mrf.mxu0
    %v333 = vadd.f32 0.0, %v332
    %v334 = vpop.f32.mrf.mxu0
    %v335 = vadd.f32 0.0, %v334
    %336 = vmatmul.bf16.gmra.mxu0 %v204
    %v337 = vpop.f32.mrf.mxu0
    %v338 = vadd.f32 0.0, %v337
    %v339 = vpop.f32.mrf.mxu0
    %v340 = vadd.f32 0.0, %v339
    %341 = vmatmul.bf16.gmra.mxu0 %v205
    %v342 = vpop.f32.mrf.mxu0
    %v343 = vadd.f32 0.0, %v342
    %v344 = vpop.f32.mrf.mxu0
    %v345 = vadd.f32 0.0, %v344
    %346 = vmatmul.bf16.gmra.mxu0 %v206
    %v347 = vpop.f32.mrf.mxu0
    %v348 = vadd.f32 0.0, %v347
    %v349 = vpop.f32.mrf.mxu0
    %v350 = vadd.f32 0.0, %v349
    %351 = vmatmul.bf16.gmra.mxu0 %v207
    %v352 = vpop.f32.mrf.mxu0
    %v353 = vadd.f32 0.0, %v352
    %v354 = vpop.f32.mrf.mxu0
    %v355 = vadd.f32 0.0, %v354
    %356 = vmatmul.bf16.gmra.mxu0 %v208
    %v357 = vpop.f32.mrf.mxu0
    %v358 = vadd.f32 0.0, %v357
    %v359 = vpop.f32.mrf.mxu0
    %v360 = vadd.f32 0.0, %v359
    %361 = vdwg.mxu0
    %v362 = vpack.c.bf16 %v285, %v283
    %v363 = vpack.c.bf16 %v290, %v288
    %v364 = vpack.c.bf16 %v295, %v293
    %v365 = vpack.c.bf16 %v300, %v298
    %v366 = vpack.c.bf16 %v305, %v303
    %v367 = vpack.c.bf16 %v310, %v308
    %v368 = vpack.c.bf16 %v315, %v313
    %v369 = vpack.c.bf16 %v320, %v318
    %v370 = vpack.c.bf16 %v325, %v323
    %v371 = vpack.c.bf16 %v330, %v328
    %v372 = vpack.c.bf16 %v335, %v333
    %v373 = vpack.c.bf16 %v340, %v338
    %v374 = vpack.c.bf16 %v345, %v343
    %v375 = vpack.c.bf16 %v350, %v348
    %v376 = vpack.c.bf16 %v355, %v353
    %v377 = vpack.c.bf16 %v360, %v358
    %v378 = vld [vmem:[#allocation2] sm:$0xff]
    %v379 = vld [vmem:[#allocation2 + $0x8] sm:$0xff]
    %v380 = vld [vmem:[#allocation2 + $0x10] sm:$0xff]
    %v381 = vld [vmem:[#allocation2 + $0x18] sm:$0xff]
    %v382 = vld [vmem:[#allocation2 + $0x20] sm:$0xff]
    %v383 = vld [vmem:[#allocation2 + $0x28] sm:$0xff]
    %v384 = vld [vmem:[#allocation2 + $0x30] sm:$0xff]
    %v385 = vld [vmem:[#allocation2 + $0x38] sm:$0xff]
    %v386 = vld [vmem:[#allocation2 + $0x40] sm:$0xff]
    %v387 = vld [vmem:[#allocation2 + $0x48] sm:$0xff]
    %v388 = vld [vmem:[#allocation2 + $0x50] sm:$0xff]
    %v389 = vld [vmem:[#allocation2 + $0x58] sm:$0xff]
    %v390 = vld [vmem:[#allocation2 + $0x60] sm:$0xff]
    %v391 = vld [vmem:[#allocation2 + $0x68] sm:$0xff]
    %v392 = vld [vmem:[#allocation2 + $0x70] sm:$0xff]
    %v393 = vld [vmem:[#allocation2 + $0x78] sm:$0xff]
    %v394 = vld [vmem:[#allocation2 + $0x80] sm:$0xff]
    %v395 = vld [vmem:[#allocation2 + $0x88] sm:$0xff]
    %v396 = vld [vmem:[#allocation2 + $0x90] sm:$0xff]
    %v397 = vld [vmem:[#allocation2 + $0x98] sm:$0xff]
    %v398 = vld [vmem:[#allocation2 + $0xa0] sm:$0xff]
    %v399 = vld [vmem:[#allocation2 + $0xa8] sm:$0xff]
    %v400 = vld [vmem:[#allocation2 + $0xb0] sm:$0xff]
    %v401 = vld [vmem:[#allocation2 + $0xb8] sm:$0xff]
    %v402 = vld [vmem:[#allocation2 + $0xc0] sm:$0xff]
    %v403 = vld [vmem:[#allocation2 + $0xc8] sm:$0xff]
    %v404 = vld [vmem:[#allocation2 + $0xd0] sm:$0xff]
    %v405 = vld [vmem:[#allocation2 + $0xd8] sm:$0xff]
    %v406 = vld [vmem:[#allocation2 + $0xe0] sm:$0xff]
    %v407 = vld [vmem:[#allocation2 + $0xe8] sm:$0xff]
    %v408 = vld [vmem:[#allocation2 + $0xf0] sm:$0xff]
    %v409 = vld [vmem:[#allocation2 + $0xf8] sm:$0xff]
    %v410 = vld [vmem:[#allocation8] sm:$0x1]
    %v412 = vperm.slane %v410, 0
    %v446 = vunpack.c.l.b16 %v378
    %v447 = vunpack.c.h.b16 %v378
    %v448 = vunpack.c.l.b16 %v379
    %v449 = vunpack.c.h.b16 %v379
    %v450 = vunpack.c.l.b16 %v380
    %v451 = vunpack.c.h.b16 %v380
    %v452 = vunpack.c.l.b16 %v381
    %v453 = vunpack.c.h.b16 %v381
    %v454 = vunpack.c.l.b16 %v382
    %v455 = vunpack.c.h.b16 %v382
    %v456 = vunpack.c.l.b16 %v383
    %v457 = vunpack.c.h.b16 %v383
    %v458 = vunpack.c.l.b16 %v384
    %v459 = vunpack.c.h.b16 %v384
    %v460 = vunpack.c.l.b16 %v385
    %v461 = vunpack.c.h.b16 %v385
    %v462 = vunpack.c.l.b16 %v386
    %v463 = vunpack.c.h.b16 %v386
    %v464 = vunpack.c.l.b16 %v387
    %v465 = vunpack.c.h.b16 %v387
    %v466 = vunpack.c.l.b16 %v388
    %v467 = vunpack.c.h.b16 %v388
    %v468 = vunpack.c.l.b16 %v389
    %v469 = vunpack.c.h.b16 %v389
    %v470 = vunpack.c.l.b16 %v390
    %v471 = vunpack.c.h.b16 %v390
    %v472 = vunpack.c.l.b16 %v391
    %v473 = vunpack.c.h.b16 %v391
    %v474 = vunpack.c.l.b16 %v392
    %v475 = vunpack.c.h.b16 %v392
    %v476 = vunpack.c.l.b16 %v393
    %v477 = vunpack.c.h.b16 %v393
    %v478 = vunpack.c.l.b16 %v394
    %v479 = vunpack.c.h.b16 %v394
    %v480 = vunpack.c.l.b16 %v395
    %v481 = vunpack.c.h.b16 %v395
    %v482 = vunpack.c.l.b16 %v396
    %v483 = vunpack.c.h.b16 %v396
    %v484 = vunpack.c.l.b16 %v397
    %v485 = vunpack.c.h.b16 %v397
    %v486 = vunpack.c.l.b16 %v398
    %v487 = vunpack.c.h.b16 %v398
    %v488 = vunpack.c.l.b16 %v399
    %v489 = vunpack.c.h.b16 %v399
    %v490 = vunpack.c.l.b16 %v400
    %v491 = vunpack.c.h.b16 %v400
    %v492 = vunpack.c.l.b16 %v401
    %v493 = vunpack.c.h.b16 %v401
    %v494 = vunpack.c.l.b16 %v402
    %v495 = vunpack.c.h.b16 %v402
    %v496 = vunpack.c.l.b16 %v403
    %v497 = vunpack.c.h.b16 %v403
    %v498 = vunpack.c.l.b16 %v404
    %v499 = vunpack.c.h.b16 %v404
    %v500 = vunpack.c.l.b16 %v405
    %v501 = vunpack.c.h.b16 %v405
    %v502 = vunpack.c.l.b16 %v406
    %v503 = vunpack.c.h.b16 %v406
    %v504 = vunpack.c.l.b16 %v407
    %v505 = vunpack.c.h.b16 %v407
    %v506 = vunpack.c.l.b16 %v408
    %v507 = vunpack.c.h.b16 %v408
    %v508 = vunpack.c.l.b16 %v409
    %v509 = vunpack.c.h.b16 %v409
    %v510 = vpack.c.b16 %v448, %v446
    %v511 = vpack.c.b16 %v449, %v447
    %v512 = vpack.c.b16 %v452, %v450
    %v513 = vpack.c.b16 %v453, %v451
    %v514 = vpack.c.b16 %v456, %v454
    %v515 = vpack.c.b16 %v457, %v455
    %v516 = vpack.c.b16 %v460, %v458
    %v517 = vpack.c.b16 %v461, %v459
    %v518 = vpack.c.b16 %v464, %v462
    %v519 = vpack.c.b16 %v465, %v463
    %v520 = vpack.c.b16 %v468, %v466
    %v521 = vpack.c.b16 %v469, %v467
    %v522 = vpack.c.b16 %v472, %v470
    %v523 = vpack.c.b16 %v473, %v471
    %v524 = vpack.c.b16 %v476, %v474
    %v525 = vpack.c.b16 %v477, %v475
    %v526 = vpack.c.b16 %v480, %v478
    %v527 = vpack.c.b16 %v481, %v479
    %v528 = vpack.c.b16 %v484, %v482
    %v529 = vpack.c.b16 %v485, %v483
    %v530 = vpack.c.b16 %v488, %v486
    %v531 = vpack.c.b16 %v489, %v487
    %v532 = vpack.c.b16 %v492, %v490
    %v533 = vpack.c.b16 %v493, %v491
    %v534 = vpack.c.b16 %v496, %v494
    %v535 = vpack.c.b16 %v497, %v495
    %v536 = vpack.c.b16 %v500, %v498
    %v537 = vpack.c.b16 %v501, %v499
    %v538 = vpack.c.b16 %v504, %v502
    %v539 = vpack.c.b16 %v505, %v503
    %v540 = vpack.c.b16 %v508, %v506
    %v541 = vpack.c.b16 %v509, %v507
    %574 = vmatpush.bf16.msra.mxu0 %v369
    %575 = vmatpush.bf16.msra.mxu0 %v368
    %576 = vmatpush.bf16.msra.mxu0 %v367
    %577 = vmatpush.bf16.msra.mxu0 %v366
    %578 = vmatpush.bf16.msra.mxu0 %v365
    %579 = vmatpush.bf16.msra.mxu0 %v364
    %580 = vmatpush.bf16.msra.mxu0 %v363
    %581 = vmatpush.bf16.msra.mxu0 %v362
    %582 = vmatmul.bf16.gmra.mxu0 %v510
    %v583 = vpop.f32.mrf.mxu0
    %v584 = vadd.f32 %v412, %v583
    %v585 = vpop.f32.mrf.mxu0
    %v586 = vadd.f32 %v412, %v585
    %587 = vmatmul.bf16.gmra.mxu0 %v512
    %v588 = vpop.f32.mrf.mxu0
    %v589 = vadd.f32 %v412, %v588
    %v590 = vpop.f32.mrf.mxu0
    %v591 = vadd.f32 %v412, %v590
    %592 = vmatmul.bf16.gmra.mxu0 %v514
    %v593 = vpop.f32.mrf.mxu0
    %v594 = vadd.f32 %v412, %v593
    %v595 = vpop.f32.mrf.mxu0
    %v596 = vadd.f32 %v412, %v595
    %597 = vmatmul.bf16.gmra.mxu0 %v516
    %v598 = vpop.f32.mrf.mxu0
    %v599 = vadd.f32 %v412, %v598
    %v600 = vpop.f32.mrf.mxu0
    %v601 = vadd.f32 %v412, %v600
    %602 = vmatmul.bf16.gmra.mxu0 %v518
    %v603 = vpop.f32.mrf.mxu0
    %v604 = vadd.f32 %v412, %v603
    %v605 = vpop.f32.mrf.mxu0
    %v606 = vadd.f32 %v412, %v605
    %607 = vmatmul.bf16.gmra.mxu0 %v520
    %v608 = vpop.f32.mrf.mxu0
    %v609 = vadd.f32 %v412, %v608
    %v610 = vpop.f32.mrf.mxu0
    %v611 = vadd.f32 %v412, %v610
    %612 = vmatmul.bf16.gmra.mxu0 %v522
    %v613 = vpop.f32.mrf.mxu0
    %v614 = vadd.f32 %v412, %v613
    %v615 = vpop.f32.mrf.mxu0
    %v616 = vadd.f32 %v412, %v615
    %617 = vmatmul.bf16.gmra.mxu0 %v524
    %v618 = vpop.f32.mrf.mxu0
    %v619 = vadd.f32 %v412, %v618
    %v620 = vpop.f32.mrf.mxu0
    %v621 = vadd.f32 %v412, %v620
    %622 = vmatmul.bf16.gmra.mxu0 %v526
    %v623 = vpop.f32.mrf.mxu0
    %v624 = vadd.f32 %v412, %v623
    %v625 = vpop.f32.mrf.mxu0
    %v626 = vadd.f32 %v412, %v625
    %627 = vmatmul.bf16.gmra.mxu0 %v528
    %v628 = vpop.f32.mrf.mxu0
    %v629 = vadd.f32 %v412, %v628
    %v630 = vpop.f32.mrf.mxu0
    %v631 = vadd.f32 %v412, %v630
    %632 = vmatmul.bf16.gmra.mxu0 %v530
    %v633 = vpop.f32.mrf.mxu0
    %v634 = vadd.f32 %v412, %v633
    %v635 = vpop.f32.mrf.mxu0
    %v636 = vadd.f32 %v412, %v635
    %637 = vmatmul.bf16.gmra.mxu0 %v532
    %v638 = vpop.f32.mrf.mxu0
    %v639 = vadd.f32 %v412, %v638
    %v640 = vpop.f32.mrf.mxu0
    %v641 = vadd.f32 %v412, %v640
    %642 = vmatmul.bf16.gmra.mxu0 %v534
    %v643 = vpop.f32.mrf.mxu0
    %v644 = vadd.f32 %v412, %v643
    %v645 = vpop.f32.mrf.mxu0
    %v646 = vadd.f32 %v412, %v645
    %647 = vmatmul.bf16.gmra.mxu0 %v536
    %v648 = vpop.f32.mrf.mxu0
    %v649 = vadd.f32 %v412, %v648
    %v650 = vpop.f32.mrf.mxu0
    %v651 = vadd.f32 %v412, %v650
    %652 = vmatmul.bf16.gmra.mxu0 %v538
    %v653 = vpop.f32.mrf.mxu0
    %v654 = vadd.f32 %v412, %v653
    %v655 = vpop.f32.mrf.mxu0
    %v656 = vadd.f32 %v412, %v655
    %657 = vmatmul.bf16.gmra.mxu0 %v540
    %v658 = vpop.f32.mrf.mxu0
    %v659 = vadd.f32 %v412, %v658
    %v660 = vpop.f32.mrf.mxu0
    %v661 = vadd.f32 %v412, %v660
    %662 = vdwg.mxu0
    %663 = vmatpush.bf16.msra.mxu0 %v377
    %664 = vmatpush.bf16.msra.mxu0 %v376
    %665 = vmatpush.bf16.msra.mxu0 %v375
    %666 = vmatpush.bf16.msra.mxu0 %v374
    %667 = vmatpush.bf16.msra.mxu0 %v373
    %668 = vmatpush.bf16.msra.mxu0 %v372
    %669 = vmatpush.bf16.msra.mxu0 %v371
    %670 = vmatpush.bf16.msra.mxu0 %v370
    %671 = vmatmul.bf16.gmra.mxu0 %v511
    %v672 = vpop.f32.mrf.mxu0
    %v673 = vadd.f32 %v584, %v672
    %v674 = vpop.f32.mrf.mxu0
    %v675 = vadd.f32 %v586, %v674
    %676 = vmatmul.bf16.gmra.mxu0 %v513
    %v677 = vpop.f32.mrf.mxu0
    %v678 = vadd.f32 %v589, %v677
    %v679 = vpop.f32.mrf.mxu0
    %v680 = vadd.f32 %v591, %v679
    %681 = vmatmul.bf16.gmra.mxu0 %v515
    %v682 = vpop.f32.mrf.mxu0
    %v683 = vadd.f32 %v594, %v682
    %v684 = vpop.f32.mrf.mxu0
    %v685 = vadd.f32 %v596, %v684
    %686 = vmatmul.bf16.gmra.mxu0 %v517
    %v687 = vpop.f32.mrf.mxu0
    %v688 = vadd.f32 %v599, %v687
    %v689 = vpop.f32.mrf.mxu0
    %v690 = vadd.f32 %v601, %v689
    %691 = vmatmul.bf16.gmra.mxu0 %v519
    %v692 = vpop.f32.mrf.mxu0
    %v693 = vadd.f32 %v604, %v692
    %v694 = vpop.f32.mrf.mxu0
    %v695 = vadd.f32 %v606, %v694
    %696 = vmatmul.bf16.gmra.mxu0 %v521
    %v697 = vpop.f32.mrf.mxu0
    %v698 = vadd.f32 %v609, %v697
    %v699 = vpop.f32.mrf.mxu0
    %v700 = vadd.f32 %v611, %v699
    %701 = vmatmul.bf16.gmra.mxu0 %v523
    %v702 = vpop.f32.mrf.mxu0
    %v703 = vadd.f32 %v614, %v702
    %v704 = vpop.f32.mrf.mxu0
    %v705 = vadd.f32 %v616, %v704
    %706 = vmatmul.bf16.gmra.mxu0 %v525
    %v707 = vpop.f32.mrf.mxu0
    %v708 = vadd.f32 %v619, %v707
    %v709 = vpop.f32.mrf.mxu0
    %v710 = vadd.f32 %v621, %v709
    %711 = vmatmul.bf16.gmra.mxu0 %v527
    %v712 = vpop.f32.mrf.mxu0
    %v713 = vadd.f32 %v624, %v712
    %v714 = vpop.f32.mrf.mxu0
    %v715 = vadd.f32 %v626, %v714
    %716 = vmatmul.bf16.gmra.mxu0 %v529
    %v717 = vpop.f32.mrf.mxu0
    %v718 = vadd.f32 %v629, %v717
    %v719 = vpop.f32.mrf.mxu0
    %v720 = vadd.f32 %v631, %v719
    %721 = vmatmul.bf16.gmra.mxu0 %v531
    %v722 = vpop.f32.mrf.mxu0
    %v723 = vadd.f32 %v634, %v722
    %v724 = vpop.f32.mrf.mxu0
    %v725 = vadd.f32 %v636, %v724
    %726 = vmatmul.bf16.gmra.mxu0 %v533
    %v727 = vpop.f32.mrf.mxu0
    %v728 = vadd.f32 %v639, %v727
    %v729 = vpop.f32.mrf.mxu0
    %v730 = vadd.f32 %v641, %v729
    %731 = vmatmul.bf16.gmra.mxu0 %v535
    %v732 = vpop.f32.mrf.mxu0
    %v733 = vadd.f32 %v644, %v732
    %v734 = vpop.f32.mrf.mxu0
    %v735 = vadd.f32 %v646, %v734
    %736 = vmatmul.bf16.gmra.mxu0 %v537
    %v737 = vpop.f32.mrf.mxu0
    %v738 = vadd.f32 %v649, %v737
    %v739 = vpop.f32.mrf.mxu0
    %v740 = vadd.f32 %v651, %v739
    %741 = vmatmul.bf16.gmra.mxu0 %v539
    %v742 = vpop.f32.mrf.mxu0
    %v743 = vadd.f32 %v654, %v742
    %v744 = vpop.f32.mrf.mxu0
    %v745 = vadd.f32 %v656, %v744
    %746 = vmatmul.bf16.gmra.mxu0 %v541
    %v747 = vpop.f32.mrf.mxu0
    %v748 = vadd.f32 %v659, %v747
    %v749 = vpop.f32.mrf.mxu0
    %v750 = vadd.f32 %v661, %v749
    %751 = vdwg.mxu0
    %v752 = vpack.c.bf16 %v675, %v673
    %v753 = vpack.c.bf16 %v680, %v678
    %v754 = vpack.c.bf16 %v685, %v683
    %v755 = vpack.c.bf16 %v690, %v688
    %v756 = vpack.c.bf16 %v695, %v693
    %v757 = vpack.c.bf16 %v700, %v698
    %v758 = vpack.c.bf16 %v705, %v703
    %v759 = vpack.c.bf16 %v710, %v708
    %v760 = vpack.c.bf16 %v715, %v713
    %v761 = vpack.c.bf16 %v720, %v718
    %v762 = vpack.c.bf16 %v725, %v723
    %v763 = vpack.c.bf16 %v730, %v728
    %v764 = vpack.c.bf16 %v735, %v733
    %v765 = vpack.c.bf16 %v740, %v738
    %v766 = vpack.c.bf16 %v745, %v743
    %v767 = vpack.c.bf16 %v750, %v748
    %s768 = scalar_lea.vmem [#allocation7], 64
    %v769 = vld [vmem:[%s768] sm:$0xf]
    %v770 = vld [vmem:[%s768 + $0x4] sm:$0xf]
    %v771 = vld [vmem:[%s768 + $0x8] sm:$0xf]
    %v772 = vld [vmem:[%s768 + $0xc] sm:$0xf]
    %v773 = vld [vmem:[%s768 + $0x10] sm:$0xf]
    %v774 = vld [vmem:[%s768 + $0x14] sm:$0xf]
    %v775 = vld [vmem:[%s768 + $0x18] sm:$0xf]
    %v776 = vld [vmem:[%s768 + $0x1c] sm:$0xf]
    %v777 = vld [vmem:[%s768 + $0x20] sm:$0xf]
    %v778 = vld [vmem:[%s768 + $0x24] sm:$0xf]
    %v779 = vld [vmem:[%s768 + $0x28] sm:$0xf]
    %v780 = vld [vmem:[%s768 + $0x2c] sm:$0xf]
    %v781 = vld [vmem:[%s768 + $0x30] sm:$0xf]
    %v782 = vld [vmem:[%s768 + $0x34] sm:$0xf]
    %v783 = vld [vmem:[%s768 + $0x38] sm:$0xf]
    %v784 = vld [vmem:[%s768 + $0x3c] sm:$0xf]
    %v801 = vunpack.c.l.b16 %v769
    %v802 = vunpack.c.l.b16 %v770
    %v803 = vunpack.c.l.b16 %v771
    %v804 = vunpack.c.l.b16 %v772
    %v805 = vunpack.c.l.b16 %v773
    %v806 = vunpack.c.l.b16 %v774
    %v807 = vunpack.c.l.b16 %v775
    %v808 = vunpack.c.l.b16 %v776
    %v809 = vunpack.c.l.b16 %v777
    %v810 = vunpack.c.l.b16 %v778
    %v811 = vunpack.c.l.b16 %v779
    %v812 = vunpack.c.l.b16 %v780
    %v813 = vunpack.c.l.b16 %v781
    %v814 = vunpack.c.l.b16 %v782
    %v815 = vunpack.c.l.b16 %v783
    %v816 = vunpack.c.l.b16 %v784
    %v817 = vpack.c.b16 %v802, %v801
    %v818 = vpack.c.b16 %v804, %v803
    %v819 = vpack.c.b16 %v806, %v805
    %v820 = vpack.c.b16 %v808, %v807
    %v821 = vpack.c.b16 %v810, %v809
    %v822 = vpack.c.b16 %v812, %v811
    %v823 = vpack.c.b16 %v814, %v813
    %v824 = vpack.c.b16 %v816, %v815
    %833 = vmatpush.bf16.msra.mxu0 %v824
    %834 = vmatpush.bf16.msra.mxu0 %v823
    %835 = vmatpush.bf16.msra.mxu0 %v822
    %836 = vmatpush.bf16.msra.mxu0 %v821
    %837 = vmatpush.bf16.msra.mxu0 %v820
    %838 = vmatpush.bf16.msra.mxu0 %v819
    %839 = vmatpush.bf16.msra.mxu0 %v818
    %840 = vmatpush.bf16.msra.mxu0 %v817
    %841 = vmatmul.bf16.gmra.mxu0 %v752
    %v842 = vpop.f32.mrf.mxu0
    %v843 = vadd.f32 0.0, %v842
    %v844 = vpop.f32.mrf.mxu0
    %v845 = vadd.f32 0.0, %v844
    %846 = vmatmul.bf16.gmra.mxu0 %v753
    %v847 = vpop.f32.mrf.mxu0
    %v848 = vadd.f32 0.0, %v847
    %v849 = vpop.f32.mrf.mxu0
    %v850 = vadd.f32 0.0, %v849
    %851 = vmatmul.bf16.gmra.mxu0 %v754
    %v852 = vpop.f32.mrf.mxu0
    %v853 = vadd.f32 0.0, %v852
    %v854 = vpop.f32.mrf.mxu0
    %v855 = vadd.f32 0.0, %v854
    %856 = vmatmul.bf16.gmra.mxu0 %v755
    %v857 = vpop.f32.mrf.mxu0
    %v858 = vadd.f32 0.0, %v857
    %v859 = vpop.f32.mrf.mxu0
    %v860 = vadd.f32 0.0, %v859
    %861 = vmatmul.bf16.gmra.mxu0 %v756
    %v862 = vpop.f32.mrf.mxu0
    %v863 = vadd.f32 0.0, %v862
    %v864 = vpop.f32.mrf.mxu0
    %v865 = vadd.f32 0.0, %v864
    %866 = vmatmul.bf16.gmra.mxu0 %v757
    %v867 = vpop.f32.mrf.mxu0
    %v868 = vadd.f32 0.0, %v867
    %v869 = vpop.f32.mrf.mxu0
    %v870 = vadd.f32 0.0, %v869
    %871 = vmatmul.bf16.gmra.mxu0 %v758
    %v872 = vpop.f32.mrf.mxu0
    %v873 = vadd.f32 0.0, %v872
    %v874 = vpop.f32.mrf.mxu0
    %v875 = vadd.f32 0.0, %v874
    %876 = vmatmul.bf16.gmra.mxu0 %v759
    %v877 = vpop.f32.mrf.mxu0
    %v878 = vadd.f32 0.0, %v877
    %v879 = vpop.f32.mrf.mxu0
    %v880 = vadd.f32 0.0, %v879
    %881 = vmatmul.bf16.gmra.mxu0 %v760
    %v882 = vpop.f32.mrf.mxu0
    %v883 = vadd.f32 0.0, %v882
    %v884 = vpop.f32.mrf.mxu0
    %v885 = vadd.f32 0.0, %v884
    %886 = vmatmul.bf16.gmra.mxu0 %v761
    %v887 = vpop.f32.mrf.mxu0
    %v888 = vadd.f32 0.0, %v887
    %v889 = vpop.f32.mrf.mxu0
    %v890 = vadd.f32 0.0, %v889
    %891 = vmatmul.bf16.gmra.mxu0 %v762
    %v892 = vpop.f32.mrf.mxu0
    %v893 = vadd.f32 0.0, %v892
    %v894 = vpop.f32.mrf.mxu0
    %v895 = vadd.f32 0.0, %v894
    %896 = vmatmul.bf16.gmra.mxu0 %v763
    %v897 = vpop.f32.mrf.mxu0
    %v898 = vadd.f32 0.0, %v897
    %v899 = vpop.f32.mrf.mxu0
    %v900 = vadd.f32 0.0, %v899
    %901 = vmatmul.bf16.gmra.mxu0 %v764
    %v902 = vpop.f32.mrf.mxu0
    %v903 = vadd.f32 0.0, %v902
    %v904 = vpop.f32.mrf.mxu0
    %v905 = vadd.f32 0.0, %v904
    %906 = vmatmul.bf16.gmra.mxu0 %v765
    %v907 = vpop.f32.mrf.mxu0
    %v908 = vadd.f32 0.0, %v907
    %v909 = vpop.f32.mrf.mxu0
    %v910 = vadd.f32 0.0, %v909
    %911 = vmatmul.bf16.gmra.mxu0 %v766
    %v912 = vpop.f32.mrf.mxu0
    %v913 = vadd.f32 0.0, %v912
    %v914 = vpop.f32.mrf.mxu0
    %v915 = vadd.f32 0.0, %v914
    %916 = vmatmul.bf16.gmra.mxu0 %v767
    %v917 = vpop.f32.mrf.mxu0
    %v918 = vadd.f32 0.0, %v917
    %v919 = vpop.f32.mrf.mxu0
    %v920 = vadd.f32 0.0, %v919
    %921 = vdwg.mxu0
    %v922 = vpack.c.bf16 %v845, %v843
    %v923 = vpack.c.bf16 %v850, %v848
    %v924 = vpack.c.bf16 %v855, %v853
    %v925 = vpack.c.bf16 %v860, %v858
    %v926 = vpack.c.bf16 %v865, %v863
    %v927 = vpack.c.bf16 %v870, %v868
    %v928 = vpack.c.bf16 %v875, %v873
    %v929 = vpack.c.bf16 %v880, %v878
    %v930 = vpack.c.bf16 %v885, %v883
    %v931 = vpack.c.bf16 %v890, %v888
    %v932 = vpack.c.bf16 %v895, %v893
    %v933 = vpack.c.bf16 %v900, %v898
    %v934 = vpack.c.bf16 %v905, %v903
    %v935 = vpack.c.bf16 %v910, %v908
    %v936 = vpack.c.bf16 %v915, %v913
    %v937 = vpack.c.bf16 %v920, %v918
    %s938 = scalar_lea.vmem [#allocation8], 1
    %v939 = vld [vmem:[%s938] sm:$0x1]
    %v941 = vperm.slane %v939, 0
    %943 = vmatpush.bf16.msra.mxu0 %v929
    %944 = vmatpush.bf16.msra.mxu0 %v928
    %945 = vmatpush.bf16.msra.mxu0 %v927
    %946 = vmatpush.bf16.msra.mxu0 %v926
    %947 = vmatpush.bf16.msra.mxu0 %v925
    %948 = vmatpush.bf16.msra.mxu0 %v924
    %949 = vmatpush.bf16.msra.mxu0 %v923
    %950 = vmatpush.bf16.msra.mxu0 %v922
    %951 = vmatmul.bf16.gmra.mxu0 %v510
    %v952 = vpop.f32.mrf.mxu0
    %v953 = vadd.f32 %v941, %v952
    %v954 = vpop.f32.mrf.mxu0
    %v955 = vadd.f32 %v941, %v954
    %956 = vmatmul.bf16.gmra.mxu0 %v512
    %v957 = vpop.f32.mrf.mxu0
    %v958 = vadd.f32 %v941, %v957
    %v959 = vpop.f32.mrf.mxu0
    %v960 = vadd.f32 %v941, %v959
    %961 = vmatmul.bf16.gmra.mxu0 %v514
    %v962 = vpop.f32.mrf.mxu0
    %v963 = vadd.f32 %v941, %v962
    %v964 = vpop.f32.mrf.mxu0
    %v965 = vadd.f32 %v941, %v964
    %966 = vmatmul.bf16.gmra.mxu0 %v516
    %v967 = vpop.f32.mrf.mxu0
    %v968 = vadd.f32 %v941, %v967
    %v969 = vpop.f32.mrf.mxu0
    %v970 = vadd.f32 %v941, %v969
    %971 = vmatmul.bf16.gmra.mxu0 %v518
    %v972 = vpop.f32.mrf.mxu0
    %v973 = vadd.f32 %v941, %v972
    %v974 = vpop.f32.mrf.mxu0
    %v975 = vadd.f32 %v941, %v974
    %976 = vmatmul.bf16.gmra.mxu0 %v520
    %v977 = vpop.f32.mrf.mxu0
    %v978 = vadd.f32 %v941, %v977
    %v979 = vpop.f32.mrf.mxu0
    %v980 = vadd.f32 %v941, %v979
    %981 = vmatmul.bf16.gmra.mxu0 %v522
    %v982 = vpop.f32.mrf.mxu0
    %v983 = vadd.f32 %v941, %v982
    %v984 = vpop.f32.mrf.mxu0
    %v985 = vadd.f32 %v941, %v984
    %986 = vmatmul.bf16.gmra.mxu0 %v524
    %v987 = vpop.f32.mrf.mxu0
    %v988 = vadd.f32 %v941, %v987
    %v989 = vpop.f32.mrf.mxu0
    %v990 = vadd.f32 %v941, %v989
    %991 = vmatmul.bf16.gmra.mxu0 %v526
    %v992 = vpop.f32.mrf.mxu0
    %v993 = vadd.f32 %v941, %v992
    %v994 = vpop.f32.mrf.mxu0
    %v995 = vadd.f32 %v941, %v994
    %996 = vmatmul.bf16.gmra.mxu0 %v528
    %v997 = vpop.f32.mrf.mxu0
    %v998 = vadd.f32 %v941, %v997
    %v999 = vpop.f32.mrf.mxu0
    %v1000 = vadd.f32 %v941, %v999
    %1001 = vmatmul.bf16.gmra.mxu0 %v530
    %v1002 = vpop.f32.mrf.mxu0
    %v1003 = vadd.f32 %v941, %v1002
    %v1004 = vpop.f32.mrf.mxu0
    %v1005 = vadd.f32 %v941, %v1004
    %1006 = vmatmul.bf16.gmra.mxu0 %v532
    %v1007 = vpop.f32.mrf.mxu0
    %v1008 = vadd.f32 %v941, %v1007
    %v1009 = vpop.f32.mrf.mxu0
    %v1010 = vadd.f32 %v941, %v1009
    %1011 = vmatmul.bf16.gmra.mxu0 %v534
    %v1012 = vpop.f32.mrf.mxu0
    %v1013 = vadd.f32 %v941, %v1012
    %v1014 = vpop.f32.mrf.mxu0
    %v1015 = vadd.f32 %v941, %v1014
    %1016 = vmatmul.bf16.gmra.mxu0 %v536
    %v1017 = vpop.f32.mrf.mxu0
    %v1018 = vadd.f32 %v941, %v1017
    %v1019 = vpop.f32.mrf.mxu0
    %v1020 = vadd.f32 %v941, %v1019
    %1021 = vmatmul.bf16.gmra.mxu0 %v538
    %v1022 = vpop.f32.mrf.mxu0
    %v1023 = vadd.f32 %v941, %v1022
    %v1024 = vpop.f32.mrf.mxu0
    %v1025 = vadd.f32 %v941, %v1024
    %1026 = vmatmul.bf16.gmra.mxu0 %v540
    %v1027 = vpop.f32.mrf.mxu0
    %v1028 = vadd.f32 %v941, %v1027
    %v1029 = vpop.f32.mrf.mxu0
    %v1030 = vadd.f32 %v941, %v1029
    %1031 = vdwg.mxu0
    %1032 = vmatpush.bf16.msra.mxu0 %v937
    %1033 = vmatpush.bf16.msra.mxu0 %v936
    %1034 = vmatpush.bf16.msra.mxu0 %v935
    %1035 = vmatpush.bf16.msra.mxu0 %v934
    %1036 = vmatpush.bf16.msra.mxu0 %v933
    %1037 = vmatpush.bf16.msra.mxu0 %v932
    %1038 = vmatpush.bf16.msra.mxu0 %v931
    %1039 = vmatpush.bf16.msra.mxu0 %v930
    %1040 = vmatmul.bf16.gmra.mxu0 %v511
    %v1041 = vpop.f32.mrf.mxu0
    %v1042 = vadd.f32 %v953, %v1041
    %v1043 = vpop.f32.mrf.mxu0
    %v1044 = vadd.f32 %v955, %v1043
    %1045 = vmatmul.bf16.gmra.mxu0 %v513
    %v1046 = vpop.f32.mrf.mxu0
    %v1047 = vadd.f32 %v958, %v1046
    %v1048 = vpop.f32.mrf.mxu0
    %v1049 = vadd.f32 %v960, %v1048
    %1050 = vmatmul.bf16.gmra.mxu0 %v515
    %v1051 = vpop.f32.mrf.mxu0
    %v1052 = vadd.f32 %v963, %v1051
    %v1053 = vpop.f32.mrf.mxu0
    %v1054 = vadd.f32 %v965, %v1053
    %1055 = vmatmul.bf16.gmra.mxu0 %v517
    %v1056 = vpop.f32.mrf.mxu0
    %v1057 = vadd.f32 %v968, %v1056
    %v1058 = vpop.f32.mrf.mxu0
    %v1059 = vadd.f32 %v970, %v1058
    %1060 = vmatmul.bf16.gmra.mxu0 %v519
    %v1061 = vpop.f32.mrf.mxu0
    %v1062 = vadd.f32 %v973, %v1061
    %v1063 = vpop.f32.mrf.mxu0
    %v1064 = vadd.f32 %v975, %v1063
    %1065 = vmatmul.bf16.gmra.mxu0 %v521
    %v1066 = vpop.f32.mrf.mxu0
    %v1067 = vadd.f32 %v978, %v1066
    %v1068 = vpop.f32.mrf.mxu0
    %v1069 = vadd.f32 %v980, %v1068
    %1070 = vmatmul.bf16.gmra.mxu0 %v523
    %v1071 = vpop.f32.mrf.mxu0
    %v1072 = vadd.f32 %v983, %v1071
    %v1073 = vpop.f32.mrf.mxu0
    %v1074 = vadd.f32 %v985, %v1073
    %1075 = vmatmul.bf16.gmra.mxu0 %v525
    %v1076 = vpop.f32.mrf.mxu0
    %v1077 = vadd.f32 %v988, %v1076
    %v1078 = vpop.f32.mrf.mxu0
    %v1079 = vadd.f32 %v990, %v1078
    %1080 = vmatmul.bf16.gmra.mxu0 %v527
    %v1081 = vpop.f32.mrf.mxu0
    %v1082 = vadd.f32 %v993, %v1081
    %v1083 = vpop.f32.mrf.mxu0
    %v1084 = vadd.f32 %v995, %v1083
    %1085 = vmatmul.bf16.gmra.mxu0 %v529
    %v1086 = vpop.f32.mrf.mxu0
    %v1087 = vadd.f32 %v998, %v1086
    %v1088 = vpop.f32.mrf.mxu0
    %v1089 = vadd.f32 %v1000, %v1088
    %1090 = vmatmul.bf16.gmra.mxu0 %v531
    %v1091 = vpop.f32.mrf.mxu0
    %v1092 = vadd.f32 %v1003, %v1091
    %v1093 = vpop.f32.mrf.mxu0
    %v1094 = vadd.f32 %v1005, %v1093
    %1095 = vmatmul.bf16.gmra.mxu0 %v533
    %v1096 = vpop.f32.mrf.mxu0
    %v1097 = vadd.f32 %v1008, %v1096
    %v1098 = vpop.f32.mrf.mxu0
    %v1099 = vadd.f32 %v1010, %v1098
    %1100 = vmatmul.bf16.gmra.mxu0 %v535
    %v1101 = vpop.f32.mrf.mxu0
    %v1102 = vadd.f32 %v1013, %v1101
    %v1103 = vpop.f32.mrf.mxu0
    %v1104 = vadd.f32 %v1015, %v1103
    %1105 = vmatmul.bf16.gmra.mxu0 %v537
    %v1106 = vpop.f32.mrf.mxu0
    %v1107 = vadd.f32 %v1018, %v1106
    %v1108 = vpop.f32.mrf.mxu0
    %v1109 = vadd.f32 %v1020, %v1108
    %1110 = vmatmul.bf16.gmra.mxu0 %v539
    %v1111 = vpop.f32.mrf.mxu0
    %v1112 = vadd.f32 %v1023, %v1111
    %v1113 = vpop.f32.mrf.mxu0
    %v1114 = vadd.f32 %v1025, %v1113
    %1115 = vmatmul.bf16.gmra.mxu0 %v541
    %v1116 = vpop.f32.mrf.mxu0
    %v1117 = vadd.f32 %v1028, %v1116
    %v1118 = vpop.f32.mrf.mxu0
    %v1119 = vadd.f32 %v1030, %v1118
    %1120 = vdwg.mxu0
    %v1121 = vpack.c.bf16 %v1044, %v1042
    %v1122 = vpack.c.bf16 %v1049, %v1047
    %v1123 = vpack.c.bf16 %v1054, %v1052
    %v1124 = vpack.c.bf16 %v1059, %v1057
    %v1125 = vpack.c.bf16 %v1064, %v1062
    %v1126 = vpack.c.bf16 %v1069, %v1067
    %v1127 = vpack.c.bf16 %v1074, %v1072
    %v1128 = vpack.c.bf16 %v1079, %v1077
    %v1129 = vpack.c.bf16 %v1084, %v1082
    %v1130 = vpack.c.bf16 %v1089, %v1087
    %v1131 = vpack.c.bf16 %v1094, %v1092
    %v1132 = vpack.c.bf16 %v1099, %v1097
    %v1133 = vpack.c.bf16 %v1104, %v1102
    %v1134 = vpack.c.bf16 %v1109, %v1107
    %v1135 = vpack.c.bf16 %v1114, %v1112
    %v1136 = vpack.c.bf16 %v1119, %v1117
    %s1137 = scalar_lea.vmem [#allocation7], 128
    %v1138 = vld [vmem:[%s1137] sm:$0xf]
    %v1139 = vld [vmem:[%s1137 + $0x4] sm:$0xf]
    %v1140 = vld [vmem:[%s1137 + $0x8] sm:$0xf]
    %v1141 = vld [vmem:[%s1137 + $0xc] sm:$0xf]
    %v1142 = vld [vmem:[%s1137 + $0x10] sm:$0xf]
    %v1143 = vld [vmem:[%s1137 + $0x14] sm:$0xf]
    %v1144 = vld [vmem:[%s1137 + $0x18] sm:$0xf]
    %v1145 = vld [vmem:[%s1137 + $0x1c] sm:$0xf]
    %v1146 = vld [vmem:[%s1137 + $0x20] sm:$0xf]
    %v1147 = vld [vmem:[%s1137 + $0x24] sm:$0xf]
    %v1148 = vld [vmem:[%s1137 + $0x28] sm:$0xf]
    %v1149 = vld [vmem:[%s1137 + $0x2c] sm:$0xf]
    %v1150 = vld [vmem:[%s1137 + $0x30] sm:$0xf]
    %v1151 = vld [vmem:[%s1137 + $0x34] sm:$0xf]
    %v1152 = vld [vmem:[%s1137 + $0x38] sm:$0xf]
    %v1153 = vld [vmem:[%s1137 + $0x3c] sm:$0xf]
    %v1170 = vunpack.c.l.b16 %v1138
    %v1171 = vunpack.c.l.b16 %v1139
    %v1172 = vunpack.c.l.b16 %v1140
    %v1173 = vunpack.c.l.b16 %v1141
    %v1174 = vunpack.c.l.b16 %v1142
    %v1175 = vunpack.c.l.b16 %v1143
    %v1176 = vunpack.c.l.b16 %v1144
    %v1177 = vunpack.c.l.b16 %v1145
    %v1178 = vunpack.c.l.b16 %v1146
    %v1179 = vunpack.c.l.b16 %v1147
    %v1180 = vunpack.c.l.b16 %v1148
    %v1181 = vunpack.c.l.b16 %v1149
    %v1182 = vunpack.c.l.b16 %v1150
    %v1183 = vunpack.c.l.b16 %v1151
    %v1184 = vunpack.c.l.b16 %v1152
    %v1185 = vunpack.c.l.b16 %v1153
    %v1186 = vpack.c.b16 %v1171, %v1170
    %v1187 = vpack.c.b16 %v1173, %v1172
    %v1188 = vpack.c.b16 %v1175, %v1174
    %v1189 = vpack.c.b16 %v1177, %v1176
    %v1190 = vpack.c.b16 %v1179, %v1178
    %v1191 = vpack.c.b16 %v1181, %v1180
    %v1192 = vpack.c.b16 %v1183, %v1182
    %v1193 = vpack.c.b16 %v1185, %v1184
    %1202 = vmatpush.bf16.msra.mxu0 %v1193
    %1203 = vmatpush.bf16.msra.mxu0 %v1192
    %1204 = vmatpush.bf16.msra.mxu0 %v1191
    %1205 = vmatpush.bf16.msra.mxu0 %v1190
    %1206 = vmatpush.bf16.msra.mxu0 %v1189
    %1207 = vmatpush.bf16.msra.mxu0 %v1188
    %1208 = vmatpush.bf16.msra.mxu0 %v1187
    %1209 = vmatpush.bf16.msra.mxu0 %v1186
    %1210 = vmatmul.bf16.gmra.mxu0 %v1121
    %v1211 = vpop.f32.mrf.mxu0
    %v1212 = vadd.f32 0.0, %v1211
    %v1213 = vpop.f32.mrf.mxu0
    %v1214 = vadd.f32 0.0, %v1213
    %1215 = vmatmul.bf16.gmra.mxu0 %v1122
    %v1216 = vpop.f32.mrf.mxu0
    %v1217 = vadd.f32 0.0, %v1216
    %v1218 = vpop.f32.mrf.mxu0
    %v1219 = vadd.f32 0.0, %v1218
    %1220 = vmatmul.bf16.gmra.mxu0 %v1123
    %v1221 = vpop.f32.mrf.mxu0
    %v1222 = vadd.f32 0.0, %v1221
    %v1223 = vpop.f32.mrf.mxu0
    %v1224 = vadd.f32 0.0, %v1223
    %1225 = vmatmul.bf16.gmra.mxu0 %v1124
    %v1226 = vpop.f32.mrf.mxu0
    %v1227 = vadd.f32 0.0, %v1226
    %v1228 = vpop.f32.mrf.mxu0
    %v1229 = vadd.f32 0.0, %v1228
    %1230 = vmatmul.bf16.gmra.mxu0 %v1125
    %v1231 = vpop.f32.mrf.mxu0
    %v1232 = vadd.f32 0.0, %v1231
    %v1233 = vpop.f32.mrf.mxu0
    %v1234 = vadd.f32 0.0, %v1233
    %1235 = vmatmul.bf16.gmra.mxu0 %v1126
    %v1236 = vpop.f32.mrf.mxu0
    %v1237 = vadd.f32 0.0, %v1236
    %v1238 = vpop.f32.mrf.mxu0
    %v1239 = vadd.f32 0.0, %v1238
    %1240 = vmatmul.bf16.gmra.mxu0 %v1127
    %v1241 = vpop.f32.mrf.mxu0
    %v1242 = vadd.f32 0.0, %v1241
    %v1243 = vpop.f32.mrf.mxu0
    %v1244 = vadd.f32 0.0, %v1243
    %1245 = vmatmul.bf16.gmra.mxu0 %v1128
    %v1246 = vpop.f32.mrf.mxu0
    %v1247 = vadd.f32 0.0, %v1246
    %v1248 = vpop.f32.mrf.mxu0
    %v1249 = vadd.f32 0.0, %v1248
    %1250 = vmatmul.bf16.gmra.mxu0 %v1129
    %v1251 = vpop.f32.mrf.mxu0
    %v1252 = vadd.f32 0.0, %v1251
    %v1253 = vpop.f32.mrf.mxu0
    %v1254 = vadd.f32 0.0, %v1253
    %1255 = vmatmul.bf16.gmra.mxu0 %v1130
    %v1256 = vpop.f32.mrf.mxu0
    %v1257 = vadd.f32 0.0, %v1256
    %v1258 = vpop.f32.mrf.mxu0
    %v1259 = vadd.f32 0.0, %v1258
    %1260 = vmatmul.bf16.gmra.mxu0 %v1131
    %v1261 = vpop.f32.mrf.mxu0
    %v1262 = vadd.f32 0.0, %v1261
    %v1263 = vpop.f32.mrf.mxu0
    %v1264 = vadd.f32 0.0, %v1263
    %1265 = vmatmul.bf16.gmra.mxu0 %v1132
    %v1266 = vpop.f32.mrf.mxu0
    %v1267 = vadd.f32 0.0, %v1266
    %v1268 = vpop.f32.mrf.mxu0
    %v1269 = vadd.f32 0.0, %v1268
    %1270 = vmatmul.bf16.gmra.mxu0 %v1133
    %v1271 = vpop.f32.mrf.mxu0
    %v1272 = vadd.f32 0.0, %v1271
    %v1273 = vpop.f32.mrf.mxu0
    %v1274 = vadd.f32 0.0, %v1273
    %1275 = vmatmul.bf16.gmra.mxu0 %v1134
    %v1276 = vpop.f32.mrf.mxu0
    %v1277 = vadd.f32 0.0, %v1276
    %v1278 = vpop.f32.mrf.mxu0
    %v1279 = vadd.f32 0.0, %v1278
    %1280 = vmatmul.bf16.gmra.mxu0 %v1135
    %v1281 = vpop.f32.mrf.mxu0
    %v1282 = vadd.f32 0.0, %v1281
    %v1283 = vpop.f32.mrf.mxu0
    %v1284 = vadd.f32 0.0, %v1283
    %1285 = vmatmul.bf16.gmra.mxu0 %v1136
    %v1286 = vpop.f32.mrf.mxu0
    %v1287 = vadd.f32 0.0, %v1286
    %v1288 = vpop.f32.mrf.mxu0
    %v1289 = vadd.f32 0.0, %v1288
    %1290 = vdwg.mxu0
    %v1291 = vpack.c.bf16 %v1214, %v1212
    %v1292 = vpack.c.bf16 %v1219, %v1217
    %v1293 = vpack.c.bf16 %v1224, %v1222
    %v1294 = vpack.c.bf16 %v1229, %v1227
    %v1295 = vpack.c.bf16 %v1234, %v1232
    %v1296 = vpack.c.bf16 %v1239, %v1237
    %v1297 = vpack.c.bf16 %v1244, %v1242
    %v1298 = vpack.c.bf16 %v1249, %v1247
    %v1299 = vpack.c.bf16 %v1254, %v1252
    %v1300 = vpack.c.bf16 %v1259, %v1257
    %v1301 = vpack.c.bf16 %v1264, %v1262
    %v1302 = vpack.c.bf16 %v1269, %v1267
    %v1303 = vpack.c.bf16 %v1274, %v1272
    %v1304 = vpack.c.bf16 %v1279, %v1277
    %v1305 = vpack.c.bf16 %v1284, %v1282
    %v1306 = vpack.c.bf16 %v1289, %v1287
    %s1307 = scalar_lea.vmem [#allocation8], 2
    %v1308 = vld [vmem:[%s1307] sm:$0x1]
    %v1310 = vperm.slane %v1308, 0
    %1312 = vmatpush.bf16.msra.mxu0 %v1298
    %1313 = vmatpush.bf16.msra.mxu0 %v1297
    %1314 = vmatpush.bf16.msra.mxu0 %v1296
    %1315 = vmatpush.bf16.msra.mxu0 %v1295
    %1316 = vmatpush.bf16.msra.mxu0 %v1294
    %1317 = vmatpush.bf16.msra.mxu0 %v1293
    %1318 = vmatpush.bf16.msra.mxu0 %v1292
    %1319 = vmatpush.bf16.msra.mxu0 %v1291
    %1320 = vmatmul.bf16.gmra.mxu0 %v510
    %v1321 = vpop.f32.mrf.mxu0
    %v1322 = vadd.f32 %v1310, %v1321
    %v1323 = vpop.f32.mrf.mxu0
    %v1324 = vadd.f32 %v1310, %v1323
    %1325 = vmatmul.bf16.gmra.mxu0 %v512
    %v1326 = vpop.f32.mrf.mxu0
    %v1327 = vadd.f32 %v1310, %v1326
    %v1328 = vpop.f32.mrf.mxu0
    %v1329 = vadd.f32 %v1310, %v1328
    %1330 = vmatmul.bf16.gmra.mxu0 %v514
    %v1331 = vpop.f32.mrf.mxu0
    %v1332 = vadd.f32 %v1310, %v1331
    %v1333 = vpop.f32.mrf.mxu0
    %v1334 = vadd.f32 %v1310, %v1333
    %1335 = vmatmul.bf16.gmra.mxu0 %v516
    %v1336 = vpop.f32.mrf.mxu0
    %v1337 = vadd.f32 %v1310, %v1336
    %v1338 = vpop.f32.mrf.mxu0
    %v1339 = vadd.f32 %v1310, %v1338
    %1340 = vmatmul.bf16.gmra.mxu0 %v518
    %v1341 = vpop.f32.mrf.mxu0
    %v1342 = vadd.f32 %v1310, %v1341
    %v1343 = vpop.f32.mrf.mxu0
    %v1344 = vadd.f32 %v1310, %v1343
    %1345 = vmatmul.bf16.gmra.mxu0 %v520
    %v1346 = vpop.f32.mrf.mxu0
    %v1347 = vadd.f32 %v1310, %v1346
    %v1348 = vpop.f32.mrf.mxu0
    %v1349 = vadd.f32 %v1310, %v1348
    %1350 = vmatmul.bf16.gmra.mxu0 %v522
    %v1351 = vpop.f32.mrf.mxu0
    %v1352 = vadd.f32 %v1310, %v1351
    %v1353 = vpop.f32.mrf.mxu0
    %v1354 = vadd.f32 %v1310, %v1353
    %1355 = vmatmul.bf16.gmra.mxu0 %v524
    %v1356 = vpop.f32.mrf.mxu0
    %v1357 = vadd.f32 %v1310, %v1356
    %v1358 = vpop.f32.mrf.mxu0
    %v1359 = vadd.f32 %v1310, %v1358
    %1360 = vmatmul.bf16.gmra.mxu0 %v526
    %v1361 = vpop.f32.mrf.mxu0
    %v1362 = vadd.f32 %v1310, %v1361
    %v1363 = vpop.f32.mrf.mxu0
    %v1364 = vadd.f32 %v1310, %v1363
    %1365 = vmatmul.bf16.gmra.mxu0 %v528
    %v1366 = vpop.f32.mrf.mxu0
    %v1367 = vadd.f32 %v1310, %v1366
    %v1368 = vpop.f32.mrf.mxu0
    %v1369 = vadd.f32 %v1310, %v1368
    %1370 = vmatmul.bf16.gmra.mxu0 %v530
    %v1371 = vpop.f32.mrf.mxu0
    %v1372 = vadd.f32 %v1310, %v1371
    %v1373 = vpop.f32.mrf.mxu0
    %v1374 = vadd.f32 %v1310, %v1373
    %1375 = vmatmul.bf16.gmra.mxu0 %v532
    %v1376 = vpop.f32.mrf.mxu0
    %v1377 = vadd.f32 %v1310, %v1376
    %v1378 = vpop.f32.mrf.mxu0
    %v1379 = vadd.f32 %v1310, %v1378
    %1380 = vmatmul.bf16.gmra.mxu0 %v534
    %v1381 = vpop.f32.mrf.mxu0
    %v1382 = vadd.f32 %v1310, %v1381
    %v1383 = vpop.f32.mrf.mxu0
    %v1384 = vadd.f32 %v1310, %v1383
    %1385 = vmatmul.bf16.gmra.mxu0 %v536
    %v1386 = vpop.f32.mrf.mxu0
    %v1387 = vadd.f32 %v1310, %v1386
    %v1388 = vpop.f32.mrf.mxu0
    %v1389 = vadd.f32 %v1310, %v1388
    %1390 = vmatmul.bf16.gmra.mxu0 %v538
    %v1391 = vpop.f32.mrf.mxu0
    %v1392 = vadd.f32 %v1310, %v1391
    %v1393 = vpop.f32.mrf.mxu0
    %v1394 = vadd.f32 %v1310, %v1393
    %1395 = vmatmul.bf16.gmra.mxu0 %v540
    %v1396 = vpop.f32.mrf.mxu0
    %v1397 = vadd.f32 %v1310, %v1396
    %v1398 = vpop.f32.mrf.mxu0
    %v1399 = vadd.f32 %v1310, %v1398
    %1400 = vdwg.mxu0
    %1401 = vmatpush.bf16.msra.mxu0 %v1306
    %1402 = vmatpush.bf16.msra.mxu0 %v1305
    %1403 = vmatpush.bf16.msra.mxu0 %v1304
    %1404 = vmatpush.bf16.msra.mxu0 %v1303
    %1405 = vmatpush.bf16.msra.mxu0 %v1302
    %1406 = vmatpush.bf16.msra.mxu0 %v1301
    %1407 = vmatpush.bf16.msra.mxu0 %v1300
    %1408 = vmatpush.bf16.msra.mxu0 %v1299
    %1409 = vmatmul.bf16.gmra.mxu0 %v511
    %v1410 = vpop.f32.mrf.mxu0
    %v1411 = vadd.f32 %v1322, %v1410
    %v1412 = vpop.f32.mrf.mxu0
    %v1413 = vadd.f32 %v1324, %v1412
    %1414 = vmatmul.bf16.gmra.mxu0 %v513
    %v1415 = vpop.f32.mrf.mxu0
    %v1416 = vadd.f32 %v1327, %v1415
    %v1417 = vpop.f32.mrf.mxu0
    %v1418 = vadd.f32 %v1329, %v1417
    %1419 = vmatmul.bf16.gmra.mxu0 %v515
    %v1420 = vpop.f32.mrf.mxu0
    %v1421 = vadd.f32 %v1332, %v1420
    %v1422 = vpop.f32.mrf.mxu0
    %v1423 = vadd.f32 %v1334, %v1422
    %1424 = vmatmul.bf16.gmra.mxu0 %v517
    %v1425 = vpop.f32.mrf.mxu0
    %v1426 = vadd.f32 %v1337, %v1425
    %v1427 = vpop.f32.mrf.mxu0
    %v1428 = vadd.f32 %v1339, %v1427
    %1429 = vmatmul.bf16.gmra.mxu0 %v519
    %v1430 = vpop.f32.mrf.mxu0
    %v1431 = vadd.f32 %v1342, %v1430
    %v1432 = vpop.f32.mrf.mxu0
    %v1433 = vadd.f32 %v1344, %v1432
    %1434 = vmatmul.bf16.gmra.mxu0 %v521
    %v1435 = vpop.f32.mrf.mxu0
    %v1436 = vadd.f32 %v1347, %v1435
    %v1437 = vpop.f32.mrf.mxu0
    %v1438 = vadd.f32 %v1349, %v1437
    %1439 = vmatmul.bf16.gmra.mxu0 %v523
    %v1440 = vpop.f32.mrf.mxu0
    %v1441 = vadd.f32 %v1352, %v1440
    %v1442 = vpop.f32.mrf.mxu0
    %v1443 = vadd.f32 %v1354, %v1442
    %1444 = vmatmul.bf16.gmra.mxu0 %v525
    %v1445 = vpop.f32.mrf.mxu0
    %v1446 = vadd.f32 %v1357, %v1445
    %v1447 = vpop.f32.mrf.mxu0
    %v1448 = vadd.f32 %v1359, %v1447
    %1449 = vmatmul.bf16.gmra.mxu0 %v527
    %v1450 = vpop.f32.mrf.mxu0
    %v1451 = vadd.f32 %v1362, %v1450
    %v1452 = vpop.f32.mrf.mxu0
    %v1453 = vadd.f32 %v1364, %v1452
    %1454 = vmatmul.bf16.gmra.mxu0 %v529
    %v1455 = vpop.f32.mrf.mxu0
    %v1456 = vadd.f32 %v1367, %v1455
    %v1457 = vpop.f32.mrf.mxu0
    %v1458 = vadd.f32 %v1369, %v1457
    %1459 = vmatmul.bf16.gmra.mxu0 %v531
    %v1460 = vpop.f32.mrf.mxu0
    %v1461 = vadd.f32 %v1372, %v1460
    %v1462 = vpop.f32.mrf.mxu0
    %v1463 = vadd.f32 %v1374, %v1462
    %1464 = vmatmul.bf16.gmra.mxu0 %v533
    %v1465 = vpop.f32.mrf.mxu0
    %v1466 = vadd.f32 %v1377, %v1465
    %v1467 = vpop.f32.mrf.mxu0
    %v1468 = vadd.f32 %v1379, %v1467
    %1469 = vmatmul.bf16.gmra.mxu0 %v535
    %v1470 = vpop.f32.mrf.mxu0
    %v1471 = vadd.f32 %v1382, %v1470
    %v1472 = vpop.f32.mrf.mxu0
    %v1473 = vadd.f32 %v1384, %v1472
    %1474 = vmatmul.bf16.gmra.mxu0 %v537
    %v1475 = vpop.f32.mrf.mxu0
    %v1476 = vadd.f32 %v1387, %v1475
    %v1477 = vpop.f32.mrf.mxu0
    %v1478 = vadd.f32 %v1389, %v1477
    %1479 = vmatmul.bf16.gmra.mxu0 %v539
    %v1480 = vpop.f32.mrf.mxu0
    %v1481 = vadd.f32 %v1392, %v1480
    %v1482 = vpop.f32.mrf.mxu0
    %v1483 = vadd.f32 %v1394, %v1482
    %1484 = vmatmul.bf16.gmra.mxu0 %v541
    %v1485 = vpop.f32.mrf.mxu0
    %v1486 = vadd.f32 %v1397, %v1485
    %v1487 = vpop.f32.mrf.mxu0
    %v1488 = vadd.f32 %v1399, %v1487
    %1489 = vdwg.mxu0
    %v1490 = vpack.c.bf16 %v1413, %v1411
    %v1491 = vpack.c.bf16 %v1418, %v1416
    %v1492 = vpack.c.bf16 %v1423, %v1421
    %v1493 = vpack.c.bf16 %v1428, %v1426
    %v1494 = vpack.c.bf16 %v1433, %v1431
    %v1495 = vpack.c.bf16 %v1438, %v1436
    %v1496 = vpack.c.bf16 %v1443, %v1441
    %v1497 = vpack.c.bf16 %v1448, %v1446
    %v1498 = vpack.c.bf16 %v1453, %v1451
    %v1499 = vpack.c.bf16 %v1458, %v1456
    %v1500 = vpack.c.bf16 %v1463, %v1461
    %v1501 = vpack.c.bf16 %v1468, %v1466
    %v1502 = vpack.c.bf16 %v1473, %v1471
    %v1503 = vpack.c.bf16 %v1478, %v1476
    %v1504 = vpack.c.bf16 %v1483, %v1481
    %v1505 = vpack.c.bf16 %v1488, %v1486
    %s1506 = scalar_lea.vmem [#allocation7], 192
    %v1507 = vld [vmem:[%s1506] sm:$0xf]
    %v1508 = vld [vmem:[%s1506 + $0x4] sm:$0xf]
    %v1509 = vld [vmem:[%s1506 + $0x8] sm:$0xf]
    %v1510 = vld [vmem:[%s1506 + $0xc] sm:$0xf]
    %v1511 = vld [vmem:[%s1506 + $0x10] sm:$0xf]
    %v1512 = vld [vmem:[%s1506 + $0x14] sm:$0xf]
    %v1513 = vld [vmem:[%s1506 + $0x18] sm:$0xf]
    %v1514 = vld [vmem:[%s1506 + $0x1c] sm:$0xf]
    %v1515 = vld [vmem:[%s1506 + $0x20] sm:$0xf]
    %v1516 = vld [vmem:[%s1506 + $0x24] sm:$0xf]
    %v1517 = vld [vmem:[%s1506 + $0x28] sm:$0xf]
    %v1518 = vld [vmem:[%s1506 + $0x2c] sm:$0xf]
    %v1519 = vld [vmem:[%s1506 + $0x30] sm:$0xf]
    %v1520 = vld [vmem:[%s1506 + $0x34] sm:$0xf]
    %v1521 = vld [vmem:[%s1506 + $0x38] sm:$0xf]
    %v1522 = vld [vmem:[%s1506 + $0x3c] sm:$0xf]
    %v1539 = vunpack.c.l.b16 %v1507
    %v1540 = vunpack.c.l.b16 %v1508
    %v1541 = vunpack.c.l.b16 %v1509
    %v1542 = vunpack.c.l.b16 %v1510
    %v1543 = vunpack.c.l.b16 %v1511
    %v1544 = vunpack.c.l.b16 %v1512
    %v1545 = vunpack.c.l.b16 %v1513
    %v1546 = vunpack.c.l.b16 %v1514
    %v1547 = vunpack.c.l.b16 %v1515
    %v1548 = vunpack.c.l.b16 %v1516
    %v1549 = vunpack.c.l.b16 %v1517
    %v1550 = vunpack.c.l.b16 %v1518
    %v1551 = vunpack.c.l.b16 %v1519
    %v1552 = vunpack.c.l.b16 %v1520
    %v1553 = vunpack.c.l.b16 %v1521
    %v1554 = vunpack.c.l.b16 %v1522
    %v1555 = vpack.c.b16 %v1540, %v1539
    %v1556 = vpack.c.b16 %v1542, %v1541
    %v1557 = vpack.c.b16 %v1544, %v1543
    %v1558 = vpack.c.b16 %v1546, %v1545
    %v1559 = vpack.c.b16 %v1548, %v1547
    %v1560 = vpack.c.b16 %v1550, %v1549
    %v1561 = vpack.c.b16 %v1552, %v1551
    %v1562 = vpack.c.b16 %v1554, %v1553
    %1571 = vmatpush.bf16.msra.mxu0 %v1562
    %1572 = vmatpush.bf16.msra.mxu0 %v1561
    %1573 = vmatpush.bf16.msra.mxu0 %v1560
    %1574 = vmatpush.bf16.msra.mxu0 %v1559
    %1575 = vmatpush.bf16.msra.mxu0 %v1558
    %1576 = vmatpush.bf16.msra.mxu0 %v1557
    %1577 = vmatpush.bf16.msra.mxu0 %v1556
    %1578 = vmatpush.bf16.msra.mxu0 %v1555
    %1579 = vmatmul.bf16.gmra.mxu0 %v1490
    %v1580 = vpop.f32.mrf.mxu0
    %v1581 = vadd.f32 0.0, %v1580
    %v1582 = vpop.f32.mrf.mxu0
    %v1583 = vadd.f32 0.0, %v1582
    %1584 = vmatmul.bf16.gmra.mxu0 %v1491
    %v1585 = vpop.f32.mrf.mxu0
    %v1586 = vadd.f32 0.0, %v1585
    %v1587 = vpop.f32.mrf.mxu0
    %v1588 = vadd.f32 0.0, %v1587
    %1589 = vmatmul.bf16.gmra.mxu0 %v1492
    %v1590 = vpop.f32.mrf.mxu0
    %v1591 = vadd.f32 0.0, %v1590
    %v1592 = vpop.f32.mrf.mxu0
    %v1593 = vadd.f32 0.0, %v1592
    %1594 = vmatmul.bf16.gmra.mxu0 %v1493
    %v1595 = vpop.f32.mrf.mxu0
    %v1596 = vadd.f32 0.0, %v1595
    %v1597 = vpop.f32.mrf.mxu0
    %v1598 = vadd.f32 0.0, %v1597
    %1599 = vmatmul.bf16.gmra.mxu0 %v1494
    %v1600 = vpop.f32.mrf.mxu0
    %v1601 = vadd.f32 0.0, %v1600
    %v1602 = vpop.f32.mrf.mxu0
    %v1603 = vadd.f32 0.0, %v1602
    %1604 = vmatmul.bf16.gmra.mxu0 %v1495
    %v1605 = vpop.f32.mrf.mxu0
    %v1606 = vadd.f32 0.0, %v1605
    %v1607 = vpop.f32.mrf.mxu0
    %v1608 = vadd.f32 0.0, %v1607
    %1609 = vmatmul.bf16.gmra.mxu0 %v1496
    %v1610 = vpop.f32.mrf.mxu0
    %v1611 = vadd.f32 0.0, %v1610
    %v1612 = vpop.f32.mrf.mxu0
    %v1613 = vadd.f32 0.0, %v1612
    %1614 = vmatmul.bf16.gmra.mxu0 %v1497
    %v1615 = vpop.f32.mrf.mxu0
    %v1616 = vadd.f32 0.0, %v1615
    %v1617 = vpop.f32.mrf.mxu0
    %v1618 = vadd.f32 0.0, %v1617
    %1619 = vmatmul.bf16.gmra.mxu0 %v1498
    %v1620 = vpop.f32.mrf.mxu0
    %v1621 = vadd.f32 0.0, %v1620
    %v1622 = vpop.f32.mrf.mxu0
    %v1623 = vadd.f32 0.0, %v1622
    %1624 = vmatmul.bf16.gmra.mxu0 %v1499
    %v1625 = vpop.f32.mrf.mxu0
    %v1626 = vadd.f32 0.0, %v1625
    %v1627 = vpop.f32.mrf.mxu0
    %v1628 = vadd.f32 0.0, %v1627
    %1629 = vmatmul.bf16.gmra.mxu0 %v1500
    %v1630 = vpop.f32.mrf.mxu0
    %v1631 = vadd.f32 0.0, %v1630
    %v1632 = vpop.f32.mrf.mxu0
    %v1633 = vadd.f32 0.0, %v1632
    %1634 = vmatmul.bf16.gmra.mxu0 %v1501
    %v1635 = vpop.f32.mrf.mxu0
    %v1636 = vadd.f32 0.0, %v1635
    %v1637 = vpop.f32.mrf.mxu0
    %v1638 = vadd.f32 0.0, %v1637
    %1639 = vmatmul.bf16.gmra.mxu0 %v1502
    %v1640 = vpop.f32.mrf.mxu0
    %v1641 = vadd.f32 0.0, %v1640
    %v1642 = vpop.f32.mrf.mxu0
    %v1643 = vadd.f32 0.0, %v1642
    %1644 = vmatmul.bf16.gmra.mxu0 %v1503
    %v1645 = vpop.f32.mrf.mxu0
    %v1646 = vadd.f32 0.0, %v1645
    %v1647 = vpop.f32.mrf.mxu0
    %v1648 = vadd.f32 0.0, %v1647
    %1649 = vmatmul.bf16.gmra.mxu0 %v1504
    %v1650 = vpop.f32.mrf.mxu0
    %v1651 = vadd.f32 0.0, %v1650
    %v1652 = vpop.f32.mrf.mxu0
    %v1653 = vadd.f32 0.0, %v1652
    %1654 = vmatmul.bf16.gmra.mxu0 %v1505
    %v1655 = vpop.f32.mrf.mxu0
    %v1656 = vadd.f32 0.0, %v1655
    %v1657 = vpop.f32.mrf.mxu0
    %v1658 = vadd.f32 0.0, %v1657
    %1659 = vdwg.mxu0
    %v1660 = vpack.c.bf16 %v1583, %v1581
    %v1661 = vpack.c.bf16 %v1588, %v1586
    %v1662 = vpack.c.bf16 %v1593, %v1591
    %v1663 = vpack.c.bf16 %v1598, %v1596
    %v1664 = vpack.c.bf16 %v1603, %v1601
    %v1665 = vpack.c.bf16 %v1608, %v1606
    %v1666 = vpack.c.bf16 %v1613, %v1611
    %v1667 = vpack.c.bf16 %v1618, %v1616
    %v1668 = vpack.c.bf16 %v1623, %v1621
    %v1669 = vpack.c.bf16 %v1628, %v1626
    %v1670 = vpack.c.bf16 %v1633, %v1631
    %v1671 = vpack.c.bf16 %v1638, %v1636
    %v1672 = vpack.c.bf16 %v1643, %v1641
    %v1673 = vpack.c.bf16 %v1648, %v1646
    %v1674 = vpack.c.bf16 %v1653, %v1651
    %v1675 = vpack.c.bf16 %v1658, %v1656
    %s1676 = scalar_lea.vmem [#allocation8], 3
    %v1677 = vld [vmem:[%s1676] sm:$0x1]
    %v1679 = vperm.slane %v1677, 0
    %1681 = vmatpush.bf16.msra.mxu0 %v1667
    %1682 = vmatpush.bf16.msra.mxu0 %v1666
    %1683 = vmatpush.bf16.msra.mxu0 %v1665
    %1684 = vmatpush.bf16.msra.mxu0 %v1664
    %1685 = vmatpush.bf16.msra.mxu0 %v1663
    %1686 = vmatpush.bf16.msra.mxu0 %v1662
    %1687 = vmatpush.bf16.msra.mxu0 %v1661
    %1688 = vmatpush.bf16.msra.mxu0 %v1660
    %1689 = vmatmul.bf16.gmra.mxu0 %v510
    %v1690 = vpop.f32.mrf.mxu0
    %v1691 = vadd.f32 %v1679, %v1690
    %v1692 = vpop.f32.mrf.mxu0
    %v1693 = vadd.f32 %v1679, %v1692
    %1694 = vmatmul.bf16.gmra.mxu0 %v512
    %v1695 = vpop.f32.mrf.mxu0
    %v1696 = vadd.f32 %v1679, %v1695
    %v1697 = vpop.f32.mrf.mxu0
    %v1698 = vadd.f32 %v1679, %v1697
    %1699 = vmatmul.bf16.gmra.mxu0 %v514
    %v1700 = vpop.f32.mrf.mxu0
    %v1701 = vadd.f32 %v1679, %v1700
    %v1702 = vpop.f32.mrf.mxu0
    %v1703 = vadd.f32 %v1679, %v1702
    %1704 = vmatmul.bf16.gmra.mxu0 %v516
    %v1705 = vpop.f32.mrf.mxu0
    %v1706 = vadd.f32 %v1679, %v1705
    %v1707 = vpop.f32.mrf.mxu0
    %v1708 = vadd.f32 %v1679, %v1707
    %1709 = vmatmul.bf16.gmra.mxu0 %v518
    %v1710 = vpop.f32.mrf.mxu0
    %v1711 = vadd.f32 %v1679, %v1710
    %v1712 = vpop.f32.mrf.mxu0
    %v1713 = vadd.f32 %v1679, %v1712
    %1714 = vmatmul.bf16.gmra.mxu0 %v520
    %v1715 = vpop.f32.mrf.mxu0
    %v1716 = vadd.f32 %v1679, %v1715
    %v1717 = vpop.f32.mrf.mxu0
    %v1718 = vadd.f32 %v1679, %v1717
    %1719 = vmatmul.bf16.gmra.mxu0 %v522
    %v1720 = vpop.f32.mrf.mxu0
    %v1721 = vadd.f32 %v1679, %v1720
    %v1722 = vpop.f32.mrf.mxu0
    %v1723 = vadd.f32 %v1679, %v1722
    %1724 = vmatmul.bf16.gmra.mxu0 %v524
    %v1725 = vpop.f32.mrf.mxu0
    %v1726 = vadd.f32 %v1679, %v1725
    %v1727 = vpop.f32.mrf.mxu0
    %v1728 = vadd.f32 %v1679, %v1727
    %1729 = vmatmul.bf16.gmra.mxu0 %v526
    %v1730 = vpop.f32.mrf.mxu0
    %v1731 = vadd.f32 %v1679, %v1730
    %v1732 = vpop.f32.mrf.mxu0
    %v1733 = vadd.f32 %v1679, %v1732
    %1734 = vmatmul.bf16.gmra.mxu0 %v528
    %v1735 = vpop.f32.mrf.mxu0
    %v1736 = vadd.f32 %v1679, %v1735
    %v1737 = vpop.f32.mrf.mxu0
    %v1738 = vadd.f32 %v1679, %v1737
    %1739 = vmatmul.bf16.gmra.mxu0 %v530
    %v1740 = vpop.f32.mrf.mxu0
    %v1741 = vadd.f32 %v1679, %v1740
    %v1742 = vpop.f32.mrf.mxu0
    %v1743 = vadd.f32 %v1679, %v1742
    %1744 = vmatmul.bf16.gmra.mxu0 %v532
    %v1745 = vpop.f32.mrf.mxu0
    %v1746 = vadd.f32 %v1679, %v1745
    %v1747 = vpop.f32.mrf.mxu0
    %v1748 = vadd.f32 %v1679, %v1747
    %1749 = vmatmul.bf16.gmra.mxu0 %v534
    %v1750 = vpop.f32.mrf.mxu0
    %v1751 = vadd.f32 %v1679, %v1750
    %v1752 = vpop.f32.mrf.mxu0
    %v1753 = vadd.f32 %v1679, %v1752
    %1754 = vmatmul.bf16.gmra.mxu0 %v536
    %v1755 = vpop.f32.mrf.mxu0
    %v1756 = vadd.f32 %v1679, %v1755
    %v1757 = vpop.f32.mrf.mxu0
    %v1758 = vadd.f32 %v1679, %v1757
    %1759 = vmatmul.bf16.gmra.mxu0 %v538
    %v1760 = vpop.f32.mrf.mxu0
    %v1761 = vadd.f32 %v1679, %v1760
    %v1762 = vpop.f32.mrf.mxu0
    %v1763 = vadd.f32 %v1679, %v1762
    %1764 = vmatmul.bf16.gmra.mxu0 %v540
    %v1765 = vpop.f32.mrf.mxu0
    %v1766 = vadd.f32 %v1679, %v1765
    %v1767 = vpop.f32.mrf.mxu0
    %v1768 = vadd.f32 %v1679, %v1767
    %1769 = vdwg.mxu0
    %1770 = vmatpush.bf16.msra.mxu0 %v1675
    %1771 = vmatpush.bf16.msra.mxu0 %v1674
    %1772 = vmatpush.bf16.msra.mxu0 %v1673
    %1773 = vmatpush.bf16.msra.mxu0 %v1672
    %1774 = vmatpush.bf16.msra.mxu0 %v1671
    %1775 = vmatpush.bf16.msra.mxu0 %v1670
    %1776 = vmatpush.bf16.msra.mxu0 %v1669
    %1777 = vmatpush.bf16.msra.mxu0 %v1668
    %1778 = vmatmul.bf16.gmra.mxu0 %v511
    %v1779 = vpop.f32.mrf.mxu0
    %v1780 = vadd.f32 %v1691, %v1779
    %v1781 = vpop.f32.mrf.mxu0
    %v1782 = vadd.f32 %v1693, %v1781
    %1783 = vmatmul.bf16.gmra.mxu0 %v513
    %v1784 = vpop.f32.mrf.mxu0
    %v1785 = vadd.f32 %v1696, %v1784
    %v1786 = vpop.f32.mrf.mxu0
    %v1787 = vadd.f32 %v1698, %v1786
    %1788 = vmatmul.bf16.gmra.mxu0 %v515
    %v1789 = vpop.f32.mrf.mxu0
    %v1790 = vadd.f32 %v1701, %v1789
    %v1791 = vpop.f32.mrf.mxu0
    %v1792 = vadd.f32 %v1703, %v1791
    %1793 = vmatmul.bf16.gmra.mxu0 %v517
    %v1794 = vpop.f32.mrf.mxu0
    %v1795 = vadd.f32 %v1706, %v1794
    %v1796 = vpop.f32.mrf.mxu0
    %v1797 = vadd.f32 %v1708, %v1796
    %1798 = vmatmul.bf16.gmra.mxu0 %v519
    %v1799 = vpop.f32.mrf.mxu0
    %v1800 = vadd.f32 %v1711, %v1799
    %v1801 = vpop.f32.mrf.mxu0
    %v1802 = vadd.f32 %v1713, %v1801
    %1803 = vmatmul.bf16.gmra.mxu0 %v521
    %v1804 = vpop.f32.mrf.mxu0
    %v1805 = vadd.f32 %v1716, %v1804
    %v1806 = vpop.f32.mrf.mxu0
    %v1807 = vadd.f32 %v1718, %v1806
    %1808 = vmatmul.bf16.gmra.mxu0 %v523
    %v1809 = vpop.f32.mrf.mxu0
    %v1810 = vadd.f32 %v1721, %v1809
    %v1811 = vpop.f32.mrf.mxu0
    %v1812 = vadd.f32 %v1723, %v1811
    %1813 = vmatmul.bf16.gmra.mxu0 %v525
    %v1814 = vpop.f32.mrf.mxu0
    %v1815 = vadd.f32 %v1726, %v1814
    %v1816 = vpop.f32.mrf.mxu0
    %v1817 = vadd.f32 %v1728, %v1816
    %1818 = vmatmul.bf16.gmra.mxu0 %v527
    %v1819 = vpop.f32.mrf.mxu0
    %v1820 = vadd.f32 %v1731, %v1819
    %v1821 = vpop.f32.mrf.mxu0
    %v1822 = vadd.f32 %v1733, %v1821
    %1823 = vmatmul.bf16.gmra.mxu0 %v529
    %v1824 = vpop.f32.mrf.mxu0
    %v1825 = vadd.f32 %v1736, %v1824
    %v1826 = vpop.f32.mrf.mxu0
    %v1827 = vadd.f32 %v1738, %v1826
    %1828 = vmatmul.bf16.gmra.mxu0 %v531
    %v1829 = vpop.f32.mrf.mxu0
    %v1830 = vadd.f32 %v1741, %v1829
    %v1831 = vpop.f32.mrf.mxu0
    %v1832 = vadd.f32 %v1743, %v1831
    %1833 = vmatmul.bf16.gmra.mxu0 %v533
    %v1834 = vpop.f32.mrf.mxu0
    %v1835 = vadd.f32 %v1746, %v1834
    %v1836 = vpop.f32.mrf.mxu0
    %v1837 = vadd.f32 %v1748, %v1836
    %1838 = vmatmul.bf16.gmra.mxu0 %v535
    %v1839 = vpop.f32.mrf.mxu0
    %v1840 = vadd.f32 %v1751, %v1839
    %v1841 = vpop.f32.mrf.mxu0
    %v1842 = vadd.f32 %v1753, %v1841
    %1843 = vmatmul.bf16.gmra.mxu0 %v537
    %v1844 = vpop.f32.mrf.mxu0
    %v1845 = vadd.f32 %v1756, %v1844
    %v1846 = vpop.f32.mrf.mxu0
    %v1847 = vadd.f32 %v1758, %v1846
    %1848 = vmatmul.bf16.gmra.mxu0 %v539
    %v1849 = vpop.f32.mrf.mxu0
    %v1850 = vadd.f32 %v1761, %v1849
    %v1851 = vpop.f32.mrf.mxu0
    %v1852 = vadd.f32 %v1763, %v1851
    %1853 = vmatmul.bf16.gmra.mxu0 %v541
    %v1854 = vpop.f32.mrf.mxu0
    %v1855 = vadd.f32 %v1766, %v1854
    %v1856 = vpop.f32.mrf.mxu0
    %v1857 = vadd.f32 %v1768, %v1856
    %1858 = vdwg.mxu0
    %1859 = vst [vmem:[#allocation10] sm:$0xff] %v1780
    %1860 = vst [vmem:[#allocation10 + $0x8] sm:$0xff] %v1782
    %1861 = vst [vmem:[#allocation10 + $0x10] sm:$0xff] %v1785
    %1862 = vst [vmem:[#allocation10 + $0x18] sm:$0xff] %v1787
    %1863 = vst [vmem:[#allocation10 + $0x20] sm:$0xff] %v1790
    %1864 = vst [vmem:[#allocation10 + $0x28] sm:$0xff] %v1792
    %1865 = vst [vmem:[#allocation10 + $0x30] sm:$0xff] %v1795
    %1866 = vst [vmem:[#allocation10 + $0x38] sm:$0xff] %v1797
    %1867 = vst [vmem:[#allocation10 + $0x40] sm:$0xff] %v1800
    %1868 = vst [vmem:[#allocation10 + $0x48] sm:$0xff] %v1802
    %1869 = vst [vmem:[#allocation10 + $0x50] sm:$0xff] %v1805
    %1870 = vst [vmem:[#allocation10 + $0x58] sm:$0xff] %v1807
    %1871 = vst [vmem:[#allocation10 + $0x60] sm:$0xff] %v1810
    %1872 = vst [vmem:[#allocation10 + $0x68] sm:$0xff] %v1812
    %1873 = vst [vmem:[#allocation10 + $0x70] sm:$0xff] %v1815
    %1874 = vst [vmem:[#allocation10 + $0x78] sm:$0xff] %v1817
    %1875 = vst [vmem:[#allocation10 + $0x80] sm:$0xff] %v1820
    %1876 = vst [vmem:[#allocation10 + $0x88] sm:$0xff] %v1822
    %1877 = vst [vmem:[#allocation10 + $0x90] sm:$0xff] %v1825
    %1878 = vst [vmem:[#allocation10 + $0x98] sm:$0xff] %v1827
    %1879 = vst [vmem:[#allocation10 + $0xa0] sm:$0xff] %v1830
    %1880 = vst [vmem:[#allocation10 + $0xa8] sm:$0xff] %v1832
    %1881 = vst [vmem:[#allocation10 + $0xb0] sm:$0xff] %v1835
    %1882 = vst [vmem:[#allocation10 + $0xb8] sm:$0xff] %v1837
    %1883 = vst [vmem:[#allocation10 + $0xc0] sm:$0xff] %v1840
    %1884 = vst [vmem:[#allocation10 + $0xc8] sm:$0xff] %v1842
    %1885 = vst [vmem:[#allocation10 + $0xd0] sm:$0xff] %v1845
    %1886 = vst [vmem:[#allocation10 + $0xd8] sm:$0xff] %v1847
    %1887 = vst [vmem:[#allocation10 + $0xe0] sm:$0xff] %v1850
    %1888 = vst [vmem:[#allocation10 + $0xe8] sm:$0xff] %v1852
    %1889 = vst [vmem:[#allocation10 + $0xf0] sm:$0xff] %v1855
    %1890 = vst [vmem:[#allocation10 + $0xf8] sm:$0xff] %v1857
    // Predicated region
    $region34: #{tpu_custom_call.1} parent=1 // pred_check
      _
    $region35: #{tpu_custom_call.1} parent=1 // pred_check_branch
      %1892 = sbr.rel (0) target = $region37
    $region36: #{tpu_custom_call.1} parent=1 // pred_region
      %1894 = vsyncadd [#allocation4], 0
      %s1895 = sshll.u32 [#allocation10], 4
      %s1896 = int_to_ptr.vmem [resolvable:$true] %s1895
      %s1897 = sshll.u32 %s4, 4
      %s1898 = int_to_ptr.hbm [resolvable:$true] %s1897
      %1903 = dma.vmem_to_hbm [thread:$0]  %s1896, 4096, %s1898, [#allocation4], 128, 128, 8
    $region37: #{tpu_custom_call.1} parent=1 // pred_fallthru
      _
    // Predicated region
    $region38: #{tpu_custom_call.1} parent=1 // pred_check
      _
    $region39: #{tpu_custom_call.1} parent=1 // pred_check_branch
      %1905 = sbr.rel (0) target = $region41
    $region40: #{tpu_custom_call.1} parent=1 // pred_region
      %1907 = dma.done [#allocation4], 4096
    $region41: #{tpu_custom_call.1} parent=1 // pred_fallthru
      _
    %1908 = vsyncpa [#allocation3], 1
    %1909 = vsyncpa [#allocation6], 1
    %1910 = vsyncpa [#allocation9], 1
    %1911 = vsyncpa [#allocation4], 1

</llo_original>
